<compile_context>
chip_gen: v7x
topology: tpu7x:2x2x1
jax: 0.10.0
libtpu: 0.0.40
codegen_flags: <defaults>
</compile_context>

<pallas_src>
import functools

import jax
import jax.numpy as jnp
from jax import lax
from jax.experimental import pallas as pl
from jax.experimental.pallas import tpu as pltpu


# ----------------------------- kernel ---------------------------------------

def _layer_norm(x, gamma, beta, eps=1e-5):
    mu = jnp.mean(x, axis=-1, keepdims=True)
    var = jnp.mean((x - mu) ** 2, axis=-1, keepdims=True)
    return (x - mu) * lax.rsqrt(var + eps) * gamma + beta


def _encoder_layer_kernel(num_heads,
                          vlen_ref,                 # SMEM (B,) int32 (prefetch)
                          q_ref, k_ref, v_ref,      # (Q,D) (K,D) (K,D) VMEM
                          wqkv_ref,                 # (3H, D, dh): q|k|v per head
                          wo_w2_ref,                # (D+F, D): wo rows 0..D-1, w2 rows D..
                          w1_b1_ref,                # (D+1, F): w1 rows 0..D-1, b1 row D
                          vecs_ref,                 # (5, D): ln1_g, ln1_b, ln2_g, ln2_b, b2
                          out_ref,                  # (Q, D)
                          o_heads):                 # VMEM scratch (Q, D)
    f32 = jnp.float32

    b = pl.program_id(0)
    vlen = vlen_ref[b]

    x = q_ref[...]                                  # (Q, D) residual input
    kin = k_ref[...]                                # (K, D)
    vin = v_ref[...]                                # (K, D)

    Qn, D = x.shape
    Kn = kin.shape[0]
    H = num_heads
    dh = D // H
    scale = jnp.float32(1.0 / (dh ** 0.5))
    neg = jnp.float32(-1e6)                         # d2l masked_softmax convention

    # valid-length mask built in-kernel from the SMEM scalar (no mask DMA).
    kidx = lax.broadcasted_iota(jnp.int32, (Qn, Kn), 1)
    keep = kidx < vlen
    # TODO(synk): valid_lens = mask.sum(-1) assumes a left-contiguous (prefix)
    # mask, same as the PyTorch module's d2l convention.

    # --- multi-head attention: per-head projections via pre-split weights ---
    for h in range(H):                              # static unroll, H small
        lo = h * dh
        qh = jnp.dot(x,   wqkv_ref[h],         preferred_element_type=f32)  # (Q, dh)
        kh = jnp.dot(kin, wqkv_ref[H + h],     preferred_element_type=f32)  # (K, dh)
        vh = jnp.dot(vin, wqkv_ref[2 * H + h], preferred_element_type=f32)  # (K, dh)
        # scores: contract last dims directly (no transpose)
        s = lax.dot_general(qh, kh, (((1,), (1,)), ((), ())),
                            preferred_element_type=f32) * scale             # (Q, K)
        s = jnp.where(keep, s, neg)
        s = s - jnp.max(s, axis=-1, keepdims=True)
        e = jnp.exp(s)
        a = e / jnp.sum(e, axis=-1, keepdims=True)   # exact divide (parity)
        oh = jnp.dot(a, vh, preferred_element_type=f32)                      # (Q, dh)
        o_heads[:, lo:lo + dh] = oh                  # gather heads in scratch

    # single K=D output projection instead of H K=dh accumulations
    attn = jnp.dot(o_heads[...], wo_w2_ref[0:D, :], preferred_element_type=f32)

    # --- AddNorm 1 ---
    y = _layer_norm(x + attn, vecs_ref[0:1, :], vecs_ref[1:2, :])

    # --- FFN with exact (erf) GELU ---
    h1 = jnp.dot(y, w1_b1_ref[0:D, :], preferred_element_type=f32) + w1_b1_ref[D:D + 1, :]
    h1 = 0.5 * h1 * (1.0 + lax.erf(h1 * jnp.float32(0.7071067811865475)))
    ffn = jnp.dot(h1, wo_w2_ref[D:, :], preferred_element_type=f32) + vecs_ref[4:5, :]

    # --- AddNorm 2 ---
    z = _layer_norm(y + ffn, vecs_ref[2:3, :], vecs_ref[3:4, :])
    out_ref[...] = z.astype(out_ref.dtype)
    # TODO(synk): dropout layers are identity here (eval-mode semantics).


# ----------------------------- wrapper ---------------------------------------

def _encoder_layer_pallas(query, key, value, valid_lens, p, num_heads):
    B, Q, D = query.shape
    K = key.shape[1]
    H = num_heads
    dh = D // H

    # --- coalesce parameters: 16 tensors -> 4 packed arrays (fewer DMAs) ---
    def per_head(w):                                 # (D, D) -> (H, D, dh)
        return w.reshape(D, H, dh).transpose(1, 0, 2)

    wqkv = jnp.concatenate([per_head(p["wq"]), per_head(p["wk"]),
                            per_head(p["wv"])], axis=0)          # (3H, D, dh)
    wo_w2 = jnp.concatenate([p["wo"], p["w2"]], axis=0)          # (D+F, D)
    w1_b1 = jnp.concatenate([p["w1"], p["b1"]], axis=0)          # (D+1, F)
    vecs = jnp.concatenate([p["ln1_g"], p["ln1_b"], p["ln2_g"],
                            p["ln2_b"], p["b2"]], axis=0)        # (5, D)

    kernel = functools.partial(_encoder_layer_kernel, num_heads)

    def full(shape):
        return pl.BlockSpec(shape, lambda b, vl, _n=len(shape): (0,) * _n)

    grid_spec = pltpu.PrefetchScalarGridSpec(
        num_scalar_prefetch=1,                       # valid_lens -> SMEM
        grid=(B,),
        in_specs=[
            pl.BlockSpec((None, Q, D), lambda b, vl: (b, 0, 0)),   # query
            pl.BlockSpec((None, K, D), lambda b, vl: (b, 0, 0)),   # key
            pl.BlockSpec((None, K, D), lambda b, vl: (b, 0, 0)),   # value
            full(wqkv.shape),
            full(wo_w2.shape),
            full(w1_b1.shape),
            full(vecs.shape),
        ],
        out_specs=pl.BlockSpec((None, Q, D), lambda b, vl: (b, 0, 0)),
        scratch_shapes=[pltpu.VMEM((Q, D), jnp.float32)],
    )

    return pl.pallas_call(
        kernel,
        out_shape=jax.ShapeDtypeStruct((B, Q, D), jnp.float32),
        grid_spec=grid_spec,
        compiler_params=pltpu.CompilerParams(
            dimension_semantics=("parallel",)),      # shards over 2 TCs on v7x
    )(valid_lens, query, key, value, wqkv, wo_w2, w1_b1, vecs)


def transformer_encoder(query, key, value, mask, layer_params, num_heads):
    """Pallas version of _TransformerEncoder.forward (eval mode)."""
    B, Q, D = query.shape
    K = key.shape[1]
    if mask is not None:
        valid_lens = mask.sum(-1).astype(jnp.int32)   # mask.sum(-1)
    else:
        valid_lens = jnp.full((B,), K, dtype=jnp.int32)

    # Only the last layer's output is returned by the PyTorch loop (layers do
    # not chain), so run exactly one kernel with the last layer's params.
    p = layer_params[-1]
    return _encoder_layer_pallas(query, key, value, valid_lens, p, num_heads)


# ----------------------------- reference (pure JAX) ---------------------------

def _ref_layer(query, key, value, valid_lens, p, num_heads):
    D = query.shape[-1]
    dh = D // num_heads

    def split(x):
        B, S, _ = x.shape
        return x.reshape(B, S, num_heads, dh).transpose(0, 2, 1, 3)

    q = split(query @ p["wq"])
    k = split(key @ p["wk"])
    v = split(value @ p["wv"])
    s = jnp.einsum("bhqd,bhkd->bhqk", q, k) / jnp.sqrt(float(dh))
    kidx = jnp.arange(s.shape[-1])
    keep = kidx[None, None, None, :] < valid_lens[:, None, None, None]
    s = jnp.where(keep, s, -1e6)
    a = jax.nn.softmax(s, axis=-1)
    o = jnp.einsum("bhqk,bhkd->bhqd", a, v).transpose(0, 2, 1, 3).reshape(query.shape)
    o = o @ p["wo"]

    def ln(x, g, b):
        mu = x.mean(-1, keepdims=True)
        var = ((x - mu) ** 2).mean(-1, keepdims=True)
        return (x - mu) / jnp.sqrt(var + 1e-5) * g + b

    y = ln(query + o, p["ln1_g"][0], p["ln1_b"][0])
    h = y @ p["w1"] + p["b1"][0]
    h = 0.5 * h * (1.0 + jax.scipy.special.erf(h / jnp.sqrt(2.0)))
    f = h @ p["w2"] + p["b2"][0]
    return ln(y + f, p["ln2_g"][0], p["ln2_b"][0])


def _ref_encoder(query, key, value, mask, layer_params, num_heads):
    B = query.shape[0]
    K = key.shape[1]
    if mask is not None:
        valid_lens = mask.sum(-1).astype(jnp.int32)
    else:
        valid_lens = jnp.full((B,), K, dtype=jnp.int32)
    out = None
    with jax.default_matmul_precision("highest"):
        for p in layer_params:   # faithful: only last layer's output survives
            out = _ref_layer(query, key, value, valid_lens, p, num_heads)
    return out


# ----------------------------- setup / main -----------------------------------

def init_layer_params(key, input_dim, ffn_hidden):
    ks = jax.random.split(key, 7)
    f32 = jnp.float32
    return {
        # attention projections (bias=False), stored (in, out)
        "wq": 0.1 * jax.random.normal(ks[0], (input_dim, input_dim), f32),
        "wk": 0.1 * jax.random.normal(ks[1], (input_dim, input_dim), f32),
        "wv": 0.1 * jax.random.normal(ks[2], (input_dim, input_dim), f32),
        "wo": 0.1 * jax.random.normal(ks[3], (input_dim, input_dim), f32),
        # LayerNorms (PyTorch default init: ones / zeros)
        "ln1_g": jnp.ones((1, input_dim), f32),
        "ln1_b": jnp.zeros((1, input_dim), f32),
        "ln2_g": jnp.ones((1, input_dim), f32),
        "ln2_b": jnp.zeros((1, input_dim), f32),
        # FFN (bias=True)
        "w1": 0.1 * jax.random.normal(ks[4], (input_dim, ffn_hidden), f32),
        "b1": 0.1 * jax.random.normal(ks[5], (1, ffn_hidden), f32),
        "w2": 0.1 * jax.random.normal(ks[6], (ffn_hidden, input_dim), f32),
        "b2": jnp.zeros((1, input_dim), f32),
    }


if __name__ == "__main__":
    # small shapes consistent with the module
    B, Q, KV, D = 2, 8, 8, 32         # batch, query num, key/value num, input_dim
    NUM_HEADS, FFN_HIDDEN, NUM_LAYERS = 4, 64, 2

    root = jax.random.PRNGKey(0)
    k_q, k_k, k_v, k_p = jax.random.split(root, 4)

    query = jax.random.normal(k_q, (B, Q, D), jnp.float32)
    key = jax.random.normal(k_k, (B, KV, D), jnp.float32)
    value = jax.random.normal(k_v, (B, KV, D), jnp.float32)
    # mask: (B, KV) of 0/1; valid lengths 5 and 8
    mask = (jnp.arange(KV)[None, :] < jnp.array([5, 8])[:, None]).astype(jnp.float32)

    layer_params = [init_layer_params(jax.random.fold_in(k_p, l), D, FFN_HIDDEN)
                    for l in range(NUM_LAYERS)]

    run = jax.jit(functools.partial(transformer_encoder, num_heads=NUM_HEADS))
    out = run(query, key, value, mask, layer_params)
    out = jax.block_until_ready(out)

    ref = _ref_encoder(query, key, value, mask, layer_params, NUM_HEADS)
    assert out.shape == (B, Q, D)
    # exact softmax reciprocal + f32 MXU accumulation: tight tolerance.
    assert jnp.allclose(out, ref, rtol=1e-3, atol=1e-3), \
        f"max abs err {jnp.max(jnp.abs(out - ref))}"

    print("KERNEL_OK")
</pallas_src>

<mosaic_0001>
module attributes {stable_mosaic.version = 11 : i64} {
  func.func @_encoder_layer_kernel(%arg0: i32, %arg1: memref<2xi32, #tpu.memory_space<smem>>, %arg2: memref<1x8x32xf32, #tpu.memory_space<vmem>>, %arg3: memref<1x8x32xf32, #tpu.memory_space<vmem>>, %arg4: memref<1x8x32xf32, #tpu.memory_space<vmem>>, %arg5: memref<12x32x8xf32, #tpu.memory_space<vmem>>, %arg6: memref<96x32xf32, #tpu.memory_space<vmem>>, %arg7: memref<33x64xf32, #tpu.memory_space<vmem>>, %arg8: memref<5x32xf32, #tpu.memory_space<vmem>>, %arg9: memref<1x8x32xf32, #tpu.memory_space<vmem>>, %arg10: memref<8x32xf32, #tpu.memory_space<vmem>>) attributes {dimension_semantics = [#tpu.dimension_semantics<parallel>], iteration_bounds = array<i64: 2>, scalar_prefetch = 1 : i64, scratch_operands = 1 : i64, tpu.core_type = #tpu.core_type<tc>, window_params = [{transform_indices = @transform_0, window_bounds = array<i64: 1, 8, 32>}, {transform_indices = @transform_1, window_bounds = array<i64: 1, 8, 32>}, {transform_indices = @transform_2, window_bounds = array<i64: 1, 8, 32>}, {pipeline_mode = #tpu.pipeline_mode<synchronous>, transform_indices = @transform_3, window_bounds = array<i64: 12, 32, 8>}, {pipeline_mode = #tpu.pipeline_mode<synchronous>, transform_indices = @transform_4, window_bounds = array<i64: 96, 32>}, {pipeline_mode = #tpu.pipeline_mode<synchronous>, transform_indices = @transform_5, window_bounds = array<i64: 33, 64>}, {pipeline_mode = #tpu.pipeline_mode<synchronous>, transform_indices = @transform_6, window_bounds = array<i64: 5, 32>}, {transform_indices = @transform_7, window_bounds = array<i64: 1, 8, 32>}]} {
    %0 = arith.index_cast %arg0 : i32 to index
    %1 = memref.load %arg1[%0] : memref<2xi32, #tpu.memory_space<smem>>
    %c0 = arith.constant 0 : index
    %c0_0 = arith.constant 0 : index
    %c0_1 = arith.constant 0 : index
    %2 = vector.load %arg2[%c0, %c0_0, %c0_1] : memref<1x8x32xf32, #tpu.memory_space<vmem>>, vector<1x8x32xf32>
    %3 = vector.shape_cast %2 : vector<1x8x32xf32> to vector<8x32xf32>
    %c0_2 = arith.constant 0 : index
    %c0_3 = arith.constant 0 : index
    %c0_4 = arith.constant 0 : index
    %4 = vector.load %arg3[%c0_2, %c0_3, %c0_4] : memref<1x8x32xf32, #tpu.memory_space<vmem>>, vector<1x8x32xf32>
    %5 = vector.shape_cast %4 : vector<1x8x32xf32> to vector<8x32xf32>
    %c0_5 = arith.constant 0 : index
    %c0_6 = arith.constant 0 : index
    %c0_7 = arith.constant 0 : index
    %6 = vector.load %arg4[%c0_5, %c0_6, %c0_7] : memref<1x8x32xf32, #tpu.memory_space<vmem>>, vector<1x8x32xf32>
    %7 = vector.shape_cast %6 : vector<1x8x32xf32> to vector<8x32xf32>
    %8 = tpu.iota {dimensions = array<i32: 1>} : vector<8x8xi32>
    %9 = vector.broadcast %1 : i32 to vector<8x8xi32>
    %10 = arith.cmpi slt, %8, %9 : vector<8x8xi32>
    %c0_8 = arith.constant 0 : index
    %c0_9 = arith.constant 0 : index
    %c0_10 = arith.constant 0 : index
    %11 = vector.load %arg5[%c0_8, %c0_9, %c0_10] : memref<12x32x8xf32, #tpu.memory_space<vmem>>, vector<1x32x8xf32>
    %12 = vector.shape_cast %11 : vector<1x32x8xf32> to vector<32x8xf32>
    %cst = arith.constant dense<0.000000e+00> : vector<8x8xf32>
    %13 = tpu.matmul %3, %12, %cst {dimension_numbers = #tpu.dot_dimension_numbers<[1], [0], [0], [1], [0, 0, 1, 1], [], []>} : vector<8x32xf32>, vector<32x8xf32>, vector<8x8xf32> -> vector<8x8xf32>
    %c4 = arith.constant 4 : index
    %c0_11 = arith.constant 0 : index
    %c0_12 = arith.constant 0 : index
    %14 = vector.load %arg5[%c4, %c0_11, %c0_12] : memref<12x32x8xf32, #tpu.memory_space<vmem>>, vector<1x32x8xf32>
    %15 = vector.shape_cast %14 : vector<1x32x8xf32> to vector<32x8xf32>
    %cst_13 = arith.constant dense<0.000000e+00> : vector<8x8xf32>
    %16 = tpu.matmul %5, %15, %cst_13 {dimension_numbers = #tpu.dot_dimension_numbers<[1], [0], [0], [1], [0, 0, 1, 1], [], []>} : vector<8x32xf32>, vector<32x8xf32>, vector<8x8xf32> -> vector<8x8xf32>
    %c8 = arith.constant 8 : index
    %c0_14 = arith.constant 0 : index
    %c0_15 = arith.constant 0 : index
    %17 = vector.load %arg5[%c8, %c0_14, %c0_15] : memref<12x32x8xf32, #tpu.memory_space<vmem>>, vector<1x32x8xf32>
    %18 = vector.shape_cast %17 : vector<1x32x8xf32> to vector<32x8xf32>
    %cst_16 = arith.constant dense<0.000000e+00> : vector<8x8xf32>
    %19 = tpu.matmul %7, %18, %cst_16 {dimension_numbers = #tpu.dot_dimension_numbers<[1], [0], [0], [1], [0, 0, 1, 1], [], []>} : vector<8x32xf32>, vector<32x8xf32>, vector<8x8xf32> -> vector<8x8xf32>
    %cst_17 = arith.constant dense<0.000000e+00> : vector<8x8xf32>
    %20 = tpu.matmul %13, %16, %cst_17 {dimension_numbers = #tpu.dot_dimension_numbers<[1], [1], [0], [0], [0, 0, 1, 0], [], []>} : vector<8x8xf32>, vector<8x8xf32>, vector<8x8xf32> -> vector<8x8xf32>
    %cst_18 = arith.constant 0.353553385 : f32
    %21 = vector.broadcast %cst_18 : f32 to vector<8x8xf32>
    %22 = arith.mulf %20, %21 : vector<8x8xf32>
    %cst_19 = arith.constant -1.000000e+06 : f32
    %23 = vector.broadcast %cst_19 : f32 to vector<8x8xf32>
    %24 = arith.select %10, %22, %23 : vector<8x8xi1>, vector<8x8xf32>
    %cst_20 = arith.constant dense<0xFF800000> : vector<8xf32>
    %25 = vector.multi_reduction <maximumf>, %24, %cst_20 [1] : vector<8x8xf32> to vector<8xf32>
    %26 = vector.shape_cast %25 : vector<8xf32> to vector<8x1xf32>
    %27 = vector.broadcast %26 : vector<8x1xf32> to vector<8x8xf32>
    %28 = arith.subf %24, %27 : vector<8x8xf32>
    %29 = math.exp %28 : vector<8x8xf32>
    %cst_21 = arith.constant dense<0.000000e+00> : vector<8xf32>
    %30 = vector.multi_reduction <add>, %29, %cst_21 [1] : vector<8x8xf32> to vector<8xf32>
    %31 = vector.shape_cast %30 : vector<8xf32> to vector<8x1xf32>
    %32 = vector.broadcast %31 : vector<8x1xf32> to vector<8x8xf32>
    %33 = arith.divf %29, %32 : vector<8x8xf32>
    %cst_22 = arith.constant dense<0.000000e+00> : vector<8x8xf32>
    %34 = tpu.matmul %33, %19, %cst_22 {dimension_numbers = #tpu.dot_dimension_numbers<[1], [0], [0], [1], [0, 0, 1, 1], [], []>} : vector<8x8xf32>, vector<8x8xf32>, vector<8x8xf32> -> vector<8x8xf32>
    %c0_23 = arith.constant 0 : index
    %c0_24 = arith.constant 0 : index
    %35 = vector.load %arg10[%c0_23, %c0_24] : memref<8x32xf32, #tpu.memory_space<vmem>>, vector<8x8xf32>
    tpu.vector_store %arg10[%c0_23, %c0_24], %34 {strides = array<i32>} : memref<8x32xf32, #tpu.memory_space<vmem>>, vector<8x8xf32>,
    %c1 = arith.constant 1 : index
    %c0_25 = arith.constant 0 : index
    %c0_26 = arith.constant 0 : index
    %36 = vector.load %arg5[%c1, %c0_25, %c0_26] : memref<12x32x8xf32, #tpu.memory_space<vmem>>, vector<1x32x8xf32>
    %37 = vector.shape_cast %36 : vector<1x32x8xf32> to vector<32x8xf32>
    %cst_27 = arith.constant dense<0.000000e+00> : vector<8x8xf32>
    %38 = tpu.matmul %3, %37, %cst_27 {dimension_numbers = #tpu.dot_dimension_numbers<[1], [0], [0], [1], [0, 0, 1, 1], [], []>} : vector<8x32xf32>, vector<32x8xf32>, vector<8x8xf32> -> vector<8x8xf32>
    %c5 = arith.constant 5 : index
    %c0_28 = arith.constant 0 : index
    %c0_29 = arith.constant 0 : index
    %39 = vector.load %arg5[%c5, %c0_28, %c0_29] : memref<12x32x8xf32, #tpu.memory_space<vmem>>, vector<1x32x8xf32>
    %40 = vector.shape_cast %39 : vector<1x32x8xf32> to vector<32x8xf32>
    %cst_30 = arith.constant dense<0.000000e+00> : vector<8x8xf32>
    %41 = tpu.matmul %5, %40, %cst_30 {dimension_numbers = #tpu.dot_dimension_numbers<[1], [0], [0], [1], [0, 0, 1, 1], [], []>} : vector<8x32xf32>, vector<32x8xf32>, vector<8x8xf32> -> vector<8x8xf32>
    %c9 = arith.constant 9 : index
    %c0_31 = arith.constant 0 : index
    %c0_32 = arith.constant 0 : index
    %42 = vector.load %arg5[%c9, %c0_31, %c0_32] : memref<12x32x8xf32, #tpu.memory_space<vmem>>, vector<1x32x8xf32>
    %43 = vector.shape_cast %42 : vector<1x32x8xf32> to vector<32x8xf32>
    %cst_33 = arith.constant dense<0.000000e+00> : vector<8x8xf32>
    %44 = tpu.matmul %7, %43, %cst_33 {dimension_numbers = #tpu.dot_dimension_numbers<[1], [0], [0], [1], [0, 0, 1, 1], [], []>} : vector<8x32xf32>, vector<32x8xf32>, vector<8x8xf32> -> vector<8x8xf32>
    %cst_34 = arith.constant dense<0.000000e+00> : vector<8x8xf32>
    %45 = tpu.matmul %38, %41, %cst_34 {dimension_numbers = #tpu.dot_dimension_numbers<[1], [1], [0], [0], [0, 0, 1, 0], [], []>} : vector<8x8xf32>, vector<8x8xf32>, vector<8x8xf32> -> vector<8x8xf32>
    %cst_35 = arith.constant 0.353553385 : f32
    %46 = vector.broadcast %cst_35 : f32 to vector<8x8xf32>
    %47 = arith.mulf %45, %46 : vector<8x8xf32>
    %cst_36 = arith.constant -1.000000e+06 : f32
    %48 = vector.broadcast %cst_36 : f32 to vector<8x8xf32>
    %49 = arith.select %10, %47, %48 : vector<8x8xi1>, vector<8x8xf32>
    %cst_37 = arith.constant dense<0xFF800000> : vector<8xf32>
    %50 = vector.multi_reduction <maximumf>, %49, %cst_37 [1] : vector<8x8xf32> to vector<8xf32>
    %51 = vector.shape_cast %50 : vector<8xf32> to vector<8x1xf32>
    %52 = vector.broadcast %51 : vector<8x1xf32> to vector<8x8xf32>
    %53 = arith.subf %49, %52 : vector<8x8xf32>
    %54 = math.exp %53 : vector<8x8xf32>
    %cst_38 = arith.constant dense<0.000000e+00> : vector<8xf32>
    %55 = vector.multi_reduction <add>, %54, %cst_38 [1] : vector<8x8xf32> to vector<8xf32>
    %56 = vector.shape_cast %55 : vector<8xf32> to vector<8x1xf32>
    %57 = vector.broadcast %56 : vector<8x1xf32> to vector<8x8xf32>
    %58 = arith.divf %54, %57 : vector<8x8xf32>
    %cst_39 = arith.constant dense<0.000000e+00> : vector<8x8xf32>
    %59 = tpu.matmul %58, %44, %cst_39 {dimension_numbers = #tpu.dot_dimension_numbers<[1], [0], [0], [1], [0, 0, 1, 1], [], []>} : vector<8x8xf32>, vector<8x8xf32>, vector<8x8xf32> -> vector<8x8xf32>
    %c0_40 = arith.constant 0 : index
    %c8_41 = arith.constant 8 : index
    %60 = vector.load %arg10[%c0_40, %c8_41] : memref<8x32xf32, #tpu.memory_space<vmem>>, vector<8x8xf32>
    tpu.vector_store %arg10[%c0_40, %c8_41], %59 {strides = array<i32>} : memref<8x32xf32, #tpu.memory_space<vmem>>, vector<8x8xf32>,
    %c2 = arith.constant 2 : index
    %c0_42 = arith.constant 0 : index
    %c0_43 = arith.constant 0 : index
    %61 = vector.load %arg5[%c2, %c0_42, %c0_43] : memref<12x32x8xf32, #tpu.memory_space<vmem>>, vector<1x32x8xf32>
    %62 = vector.shape_cast %61 : vector<1x32x8xf32> to vector<32x8xf32>
    %cst_44 = arith.constant dense<0.000000e+00> : vector<8x8xf32>
    %63 = tpu.matmul %3, %62, %cst_44 {dimension_numbers = #tpu.dot_dimension_numbers<[1], [0], [0], [1], [0, 0, 1, 1], [], []>} : vector<8x32xf32>, vector<32x8xf32>, vector<8x8xf32> -> vector<8x8xf32>
    %c6 = arith.constant 6 : index
    %c0_45 = arith.constant 0 : index
    %c0_46 = arith.constant 0 : index
    %64 = vector.load %arg5[%c6, %c0_45, %c0_46] : memref<12x32x8xf32, #tpu.memory_space<vmem>>, vector<1x32x8xf32>
    %65 = vector.shape_cast %64 : vector<1x32x8xf32> to vector<32x8xf32>
    %cst_47 = arith.constant dense<0.000000e+00> : vector<8x8xf32>
    %66 = tpu.matmul %5, %65, %cst_47 {dimension_numbers = #tpu.dot_dimension_numbers<[1], [0], [0], [1], [0, 0, 1, 1], [], []>} : vector<8x32xf32>, vector<32x8xf32>, vector<8x8xf32> -> vector<8x8xf32>
    %c10 = arith.constant 10 : index
    %c0_48 = arith.constant 0 : index
    %c0_49 = arith.constant 0 : index
    %67 = vector.load %arg5[%c10, %c0_48, %c0_49] : memref<12x32x8xf32, #tpu.memory_space<vmem>>, vector<1x32x8xf32>
    %68 = vector.shape_cast %67 : vector<1x32x8xf32> to vector<32x8xf32>
    %cst_50 = arith.constant dense<0.000000e+00> : vector<8x8xf32>
    %69 = tpu.matmul %7, %68, %cst_50 {dimension_numbers = #tpu.dot_dimension_numbers<[1], [0], [0], [1], [0, 0, 1, 1], [], []>} : vector<8x32xf32>, vector<32x8xf32>, vector<8x8xf32> -> vector<8x8xf32>
    %cst_51 = arith.constant dense<0.000000e+00> : vector<8x8xf32>
    %70 = tpu.matmul %63, %66, %cst_51 {dimension_numbers = #tpu.dot_dimension_numbers<[1], [1], [0], [0], [0, 0, 1, 0], [], []>} : vector<8x8xf32>, vector<8x8xf32>, vector<8x8xf32> -> vector<8x8xf32>
    %cst_52 = arith.constant 0.353553385 : f32
    %71 = vector.broadcast %cst_52 : f32 to vector<8x8xf32>
    %72 = arith.mulf %70, %71 : vector<8x8xf32>
    %cst_53 = arith.constant -1.000000e+06 : f32
    %73 = vector.broadcast %cst_53 : f32 to vector<8x8xf32>
    %74 = arith.select %10, %72, %73 : vector<8x8xi1>, vector<8x8xf32>
    %cst_54 = arith.constant dense<0xFF800000> : vector<8xf32>
    %75 = vector.multi_reduction <maximumf>, %74, %cst_54 [1] : vector<8x8xf32> to vector<8xf32>
    %76 = vector.shape_cast %75 : vector<8xf32> to vector<8x1xf32>
    %77 = vector.broadcast %76 : vector<8x1xf32> to vector<8x8xf32>
    %78 = arith.subf %74, %77 : vector<8x8xf32>
    %79 = math.exp %78 : vector<8x8xf32>
    %cst_55 = arith.constant dense<0.000000e+00> : vector<8xf32>
    %80 = vector.multi_reduction <add>, %79, %cst_55 [1] : vector<8x8xf32> to vector<8xf32>
    %81 = vector.shape_cast %80 : vector<8xf32> to vector<8x1xf32>
    %82 = vector.broadcast %81 : vector<8x1xf32> to vector<8x8xf32>
    %83 = arith.divf %79, %82 : vector<8x8xf32>
    %cst_56 = arith.constant dense<0.000000e+00> : vector<8x8xf32>
    %84 = tpu.matmul %83, %69, %cst_56 {dimension_numbers = #tpu.dot_dimension_numbers<[1], [0], [0], [1], [0, 0, 1, 1], [], []>} : vector<8x8xf32>, vector<8x8xf32>, vector<8x8xf32> -> vector<8x8xf32>
    %c0_57 = arith.constant 0 : index
    %c16 = arith.constant 16 : index
    %85 = vector.load %arg10[%c0_57, %c16] : memref<8x32xf32, #tpu.memory_space<vmem>>, vector<8x8xf32>
    tpu.vector_store %arg10[%c0_57, %c16], %84 {strides = array<i32>} : memref<8x32xf32, #tpu.memory_space<vmem>>, vector<8x8xf32>,
    %c3 = arith.constant 3 : index
    %c0_58 = arith.constant 0 : index
    %c0_59 = arith.constant 0 : index
    %86 = vector.load %arg5[%c3, %c0_58, %c0_59] : memref<12x32x8xf32, #tpu.memory_space<vmem>>, vector<1x32x8xf32>
    %87 = vector.shape_cast %86 : vector<1x32x8xf32> to vector<32x8xf32>
    %cst_60 = arith.constant dense<0.000000e+00> : vector<8x8xf32>
    %88 = tpu.matmul %3, %87, %cst_60 {dimension_numbers = #tpu.dot_dimension_numbers<[1], [0], [0], [1], [0, 0, 1, 1], [], []>} : vector<8x32xf32>, vector<32x8xf32>, vector<8x8xf32> -> vector<8x8xf32>
    %c7 = arith.constant 7 : index
    %c0_61 = arith.constant 0 : index
    %c0_62 = arith.constant 0 : index
    %89 = vector.load %arg5[%c7, %c0_61, %c0_62] : memref<12x32x8xf32, #tpu.memory_space<vmem>>, vector<1x32x8xf32>
    %90 = vector.shape_cast %89 : vector<1x32x8xf32> to vector<32x8xf32>
    %cst_63 = arith.constant dense<0.000000e+00> : vector<8x8xf32>
    %91 = tpu.matmul %5, %90, %cst_63 {dimension_numbers = #tpu.dot_dimension_numbers<[1], [0], [0], [1], [0, 0, 1, 1], [], []>} : vector<8x32xf32>, vector<32x8xf32>, vector<8x8xf32> -> vector<8x8xf32>
    %c11 = arith.constant 11 : index
    %c0_64 = arith.constant 0 : index
    %c0_65 = arith.constant 0 : index
    %92 = vector.load %arg5[%c11, %c0_64, %c0_65] : memref<12x32x8xf32, #tpu.memory_space<vmem>>, vector<1x32x8xf32>
    %93 = vector.shape_cast %92 : vector<1x32x8xf32> to vector<32x8xf32>
    %cst_66 = arith.constant dense<0.000000e+00> : vector<8x8xf32>
    %94 = tpu.matmul %7, %93, %cst_66 {dimension_numbers = #tpu.dot_dimension_numbers<[1], [0], [0], [1], [0, 0, 1, 1], [], []>} : vector<8x32xf32>, vector<32x8xf32>, vector<8x8xf32> -> vector<8x8xf32>
    %cst_67 = arith.constant dense<0.000000e+00> : vector<8x8xf32>
    %95 = tpu.matmul %88, %91, %cst_67 {dimension_numbers = #tpu.dot_dimension_numbers<[1], [1], [0], [0], [0, 0, 1, 0], [], []>} : vector<8x8xf32>, vector<8x8xf32>, vector<8x8xf32> -> vector<8x8xf32>
    %cst_68 = arith.constant 0.353553385 : f32
    %96 = vector.broadcast %cst_68 : f32 to vector<8x8xf32>
    %97 = arith.mulf %95, %96 : vector<8x8xf32>
    %cst_69 = arith.constant -1.000000e+06 : f32
    %98 = vector.broadcast %cst_69 : f32 to vector<8x8xf32>
    %99 = arith.select %10, %97, %98 : vector<8x8xi1>, vector<8x8xf32>
    %cst_70 = arith.constant dense<0xFF800000> : vector<8xf32>
    %100 = vector.multi_reduction <maximumf>, %99, %cst_70 [1] : vector<8x8xf32> to vector<8xf32>
    %101 = vector.shape_cast %100 : vector<8xf32> to vector<8x1xf32>
    %102 = vector.broadcast %101 : vector<8x1xf32> to vector<8x8xf32>
    %103 = arith.subf %99, %102 : vector<8x8xf32>
    %104 = math.exp %103 : vector<8x8xf32>
    %cst_71 = arith.constant dense<0.000000e+00> : vector<8xf32>
    %105 = vector.multi_reduction <add>, %104, %cst_71 [1] : vector<8x8xf32> to vector<8xf32>
    %106 = vector.shape_cast %105 : vector<8xf32> to vector<8x1xf32>
    %107 = vector.broadcast %106 : vector<8x1xf32> to vector<8x8xf32>
    %108 = arith.divf %104, %107 : vector<8x8xf32>
    %cst_72 = arith.constant dense<0.000000e+00> : vector<8x8xf32>
    %109 = tpu.matmul %108, %94, %cst_72 {dimension_numbers = #tpu.dot_dimension_numbers<[1], [0], [0], [1], [0, 0, 1, 1], [], []>} : vector<8x8xf32>, vector<8x8xf32>, vector<8x8xf32> -> vector<8x8xf32>
    %c0_73 = arith.constant 0 : index
    %c24 = arith.constant 24 : index
    %110 = vector.load %arg10[%c0_73, %c24] : memref<8x32xf32, #tpu.memory_space<vmem>>, vector<8x8xf32>
    tpu.vector_store %arg10[%c0_73, %c24], %109 {strides = array<i32>} : memref<8x32xf32, #tpu.memory_space<vmem>>, vector<8x8xf32>,
    %c0_74 = arith.constant 0 : index
    %c0_75 = arith.constant 0 : index
    %111 = vector.load %arg10[%c0_74, %c0_75] : memref<8x32xf32, #tpu.memory_space<vmem>>, vector<8x32xf32>
    %c0_76 = arith.constant 0 : index
    %c0_77 = arith.constant 0 : index
    %112 = vector.load %arg6[%c0_76, %c0_77] : memref<96x32xf32, #tpu.memory_space<vmem>>, vector<32x32xf32>
    %cst_78 = arith.constant dense<0.000000e+00> : vector<8x32xf32>
    %113 = tpu.matmul %111, %112, %cst_78 {dimension_numbers = #tpu.dot_dimension_numbers<[1], [0], [0], [1], [0, 0, 1, 1], [], []>} : vector<8x32xf32>, vector<32x32xf32>, vector<8x32xf32> -> vector<8x32xf32>
    %114 = arith.addf %3, %113 : vector<8x32xf32>
    %c0_79 = arith.constant 0 : index
    %c0_80 = arith.constant 0 : index
    %115 = vector.load %arg8[%c0_79, %c0_80] : memref<5x32xf32, #tpu.memory_space<vmem>>, vector<1x32xf32>
    %c1_81 = arith.constant 1 : index
    %c0_82 = arith.constant 0 : index
    %116 = vector.load %arg8[%c1_81, %c0_82] : memref<5x32xf32, #tpu.memory_space<vmem>>, vector<1x32xf32>
    %cst_83 = arith.constant dense<0.000000e+00> : vector<8xf32>
    %117 = vector.multi_reduction <add>, %114, %cst_83 [1] : vector<8x32xf32> to vector<8xf32>
    %118 = vector.shape_cast %117 : vector<8xf32> to vector<8x1xf32>
    %cst_84 = arith.constant 3.200000e+01 : f32
    %119 = vector.broadcast %cst_84 : f32 to vector<8x1xf32>
    %120 = arith.divf %118, %119 : vector<8x1xf32>
    %121 = vector.broadcast %120 : vector<8x1xf32> to vector<8x32xf32>
    %122 = arith.subf %114, %121 : vector<8x32xf32>
    %123 = arith.mulf %122, %122 : vector<8x32xf32>
    %cst_85 = arith.constant dense<0.000000e+00> : vector<8xf32>
    %124 = vector.multi_reduction <add>, %123, %cst_85 [1] : vector<8x32xf32> to vector<8xf32>
    %125 = vector.shape_cast %124 : vector<8xf32> to vector<8x1xf32>
    %cst_86 = arith.constant 3.200000e+01 : f32
    %126 = vector.broadcast %cst_86 : f32 to vector<8x1xf32>
    %127 = arith.divf %125, %126 : vector<8x1xf32>
    %128 = vector.broadcast %120 : vector<8x1xf32> to vector<8x32xf32>
    %129 = arith.subf %114, %128 : vector<8x32xf32>
    %cst_87 = arith.constant 9.99999974E-6 : f32
    %130 = vector.broadcast %cst_87 : f32 to vector<8x1xf32>
    %131 = arith.addf %127, %130 : vector<8x1xf32>
    %132 = math.rsqrt %131 : vector<8x1xf32>
    %133 = vector.broadcast %132 : vector<8x1xf32> to vector<8x32xf32>
    %134 = arith.mulf %129, %133 : vector<8x32xf32>
    %135 = vector.broadcast %115 : vector<1x32xf32> to vector<8x32xf32>
    %136 = arith.mulf %134, %135 : vector<8x32xf32>
    %137 = vector.broadcast %116 : vector<1x32xf32> to vector<8x32xf32>
    %138 = arith.addf %136, %137 : vector<8x32xf32>
    %c0_88 = arith.constant 0 : index
    %c0_89 = arith.constant 0 : index
    %139 = vector.load %arg7[%c0_88, %c0_89] : memref<33x64xf32, #tpu.memory_space<vmem>>, vector<32x64xf32>
    %cst_90 = arith.constant dense<0.000000e+00> : vector<8x64xf32>
    %140 = tpu.matmul %138, %139, %cst_90 {dimension_numbers = #tpu.dot_dimension_numbers<[1], [0], [0], [1], [0, 0, 1, 1], [], []>} : vector<8x32xf32>, vector<32x64xf32>, vector<8x64xf32> -> vector<8x64xf32>
    %c32 = arith.constant 32 : index
    %c0_91 = arith.constant 0 : index
    %141 = vector.load %arg7[%c32, %c0_91] : memref<33x64xf32, #tpu.memory_space<vmem>>, vector<1x64xf32>
    %142 = vector.broadcast %141 : vector<1x64xf32> to vector<8x64xf32>
    %143 = arith.addf %140, %142 : vector<8x64xf32>
    %cst_92 = arith.constant 5.000000e-01 : f32
    %144 = vector.broadcast %cst_92 : f32 to vector<8x64xf32>
    %145 = arith.mulf %144, %143 : vector<8x64xf32>
    %cst_93 = arith.constant 0.707106769 : f32
    %146 = vector.broadcast %cst_93 : f32 to vector<8x64xf32>
    %147 = arith.mulf %143, %146 : vector<8x64xf32>
    %148 = math.erf %147 : vector<8x64xf32>
    %cst_94 = arith.constant 1.000000e+00 : f32
    %149 = vector.broadcast %cst_94 : f32 to vector<8x64xf32>
    %150 = arith.addf %149, %148 : vector<8x64xf32>
    %151 = arith.mulf %145, %150 : vector<8x64xf32>
    %c32_95 = arith.constant 32 : index
    %c0_96 = arith.constant 0 : index
    %152 = vector.load %arg6[%c32_95, %c0_96] : memref<96x32xf32, #tpu.memory_space<vmem>>, vector<64x32xf32>
    %cst_97 = arith.constant dense<0.000000e+00> : vector<8x32xf32>
    %153 = tpu.matmul %151, %152, %cst_97 {dimension_numbers = #tpu.dot_dimension_numbers<[1], [0], [0], [1], [0, 0, 1, 1], [], []>} : vector<8x64xf32>, vector<64x32xf32>, vector<8x32xf32> -> vector<8x32xf32>
    %c4_98 = arith.constant 4 : index
    %c0_99 = arith.constant 0 : index
    %154 = vector.load %arg8[%c4_98, %c0_99] : memref<5x32xf32, #tpu.memory_space<vmem>>, vector<1x32xf32>
    %155 = vector.broadcast %154 : vector<1x32xf32> to vector<8x32xf32>
    %156 = arith.addf %153, %155 : vector<8x32xf32>
    %157 = arith.addf %138, %156 : vector<8x32xf32>
    %c2_100 = arith.constant 2 : index
    %c0_101 = arith.constant 0 : index
    %158 = vector.load %arg8[%c2_100, %c0_101] : memref<5x32xf32, #tpu.memory_space<vmem>>, vector<1x32xf32>
    %c3_102 = arith.constant 3 : index
    %c0_103 = arith.constant 0 : index
    %159 = vector.load %arg8[%c3_102, %c0_103] : memref<5x32xf32, #tpu.memory_space<vmem>>, vector<1x32xf32>
    %cst_104 = arith.constant dense<0.000000e+00> : vector<8xf32>
    %160 = vector.multi_reduction <add>, %157, %cst_104 [1] : vector<8x32xf32> to vector<8xf32>
    %161 = vector.shape_cast %160 : vector<8xf32> to vector<8x1xf32>
    %cst_105 = arith.constant 3.200000e+01 : f32
    %162 = vector.broadcast %cst_105 : f32 to vector<8x1xf32>
    %163 = arith.divf %161, %162 : vector<8x1xf32>
    %164 = vector.broadcast %163 : vector<8x1xf32> to vector<8x32xf32>
    %165 = arith.subf %157, %164 : vector<8x32xf32>
    %166 = arith.mulf %165, %165 : vector<8x32xf32>
    %cst_106 = arith.constant dense<0.000000e+00> : vector<8xf32>
    %167 = vector.multi_reduction <add>, %166, %cst_106 [1] : vector<8x32xf32> to vector<8xf32>
    %168 = vector.shape_cast %167 : vector<8xf32> to vector<8x1xf32>
    %cst_107 = arith.constant 3.200000e+01 : f32
    %169 = vector.broadcast %cst_107 : f32 to vector<8x1xf32>
    %170 = arith.divf %168, %169 : vector<8x1xf32>
    %171 = vector.broadcast %163 : vector<8x1xf32> to vector<8x32xf32>
    %172 = arith.subf %157, %171 : vector<8x32xf32>
    %cst_108 = arith.constant 9.99999974E-6 : f32
    %173 = vector.broadcast %cst_108 : f32 to vector<8x1xf32>
    %174 = arith.addf %170, %173 : vector<8x1xf32>
    %175 = math.rsqrt %174 : vector<8x1xf32>
    %176 = vector.broadcast %175 : vector<8x1xf32> to vector<8x32xf32>
    %177 = arith.mulf %172, %176 : vector<8x32xf32>
    %178 = vector.broadcast %158 : vector<1x32xf32> to vector<8x32xf32>
    %179 = arith.mulf %177, %178 : vector<8x32xf32>
    %180 = vector.broadcast %159 : vector<1x32xf32> to vector<8x32xf32>
    %181 = arith.addf %179, %180 : vector<8x32xf32>
    %c0_109 = arith.constant 0 : index
    %c0_110 = arith.constant 0 : index
    %c0_111 = arith.constant 0 : index
    %182 = vector.load %arg9[%c0_109, %c0_110, %c0_111] : memref<1x8x32xf32, #tpu.memory_space<vmem>>, vector<1x8x32xf32>
    %183 = vector.shape_cast %182 : vector<1x8x32xf32> to vector<8x32xf32>
    %184 = vector.shape_cast %181 : vector<8x32xf32> to vector<1x8x32xf32>
    tpu.vector_store %arg9[%c0_109, %c0_110, %c0_111], %184 {strides = array<i32>} : memref<1x8x32xf32, #tpu.memory_space<vmem>>, vector<1x8x32xf32>,
    return
  }
  func.func @transform_0(%arg0: i32, %arg1: memref<2xi32, #tpu.memory_space<smem>>) -> (i32, i32, i32) {
    %c0_i32 = arith.constant 0 : i32
    %c0_i32_0 = arith.constant 0 : i32
    %c0_i32_1 = arith.constant 0 : i32
    return %arg0, %c0_i32, %c0_i32_0 : i32, i32, i32
  }
  func.func @transform_1(%arg0: i32, %arg1: memref<2xi32, #tpu.memory_space<smem>>) -> (i32, i32, i32) {
    %c0_i32 = arith.constant 0 : i32
    %c0_i32_0 = arith.constant 0 : i32
    %c0_i32_1 = arith.constant 0 : i32
    return %arg0, %c0_i32, %c0_i32_0 : i32, i32, i32
  }
  func.func @transform_2(%arg0: i32, %arg1: memref<2xi32, #tpu.memory_space<smem>>) -> (i32, i32, i32) {
    %c0_i32 = arith.constant 0 : i32
    %c0_i32_0 = arith.constant 0 : i32
    %c0_i32_1 = arith.constant 0 : i32
    return %arg0, %c0_i32, %c0_i32_0 : i32, i32, i32
  }
  func.func @transform_3(%arg0: i32, %arg1: memref<2xi32, #tpu.memory_space<smem>>) -> (i32, i32, i32) {
    %c0_i32 = arith.constant 0 : i32
    %c0_i32_0 = arith.constant 0 : i32
    %c0_i32_1 = arith.constant 0 : i32
    %c0_i32_2 = arith.constant 0 : i32
    return %c0_i32, %c0_i32_0, %c0_i32_1 : i32, i32, i32
  }
  func.func @transform_4(%arg0: i32, %arg1: memref<2xi32, #tpu.memory_space<smem>>) -> (i32, i32) {
    %c0_i32 = arith.constant 0 : i32
    %c0_i32_0 = arith.constant 0 : i32
    %c0_i32_1 = arith.constant 0 : i32
    return %c0_i32, %c0_i32_0 : i32, i32
  }
  func.func @transform_5(%arg0: i32, %arg1: memref<2xi32, #tpu.memory_space<smem>>) -> (i32, i32) {
    %c0_i32 = arith.constant 0 : i32
    %c0_i32_0 = arith.constant 0 : i32
    %c0_i32_1 = arith.constant 0 : i32
    return %c0_i32, %c0_i32_0 : i32, i32
  }
  func.func @transform_6(%arg0: i32, %arg1: memref<2xi32, #tpu.memory_space<smem>>) -> (i32, i32) {
    %c0_i32 = arith.constant 0 : i32
    %c0_i32_0 = arith.constant 0 : i32
    %c0_i32_1 = arith.constant 0 : i32
    return %c0_i32, %c0_i32_0 : i32, i32
  }
  func.func @transform_7(%arg0: i32, %arg1: memref<2xi32, #tpu.memory_space<smem>>) -> (i32, i32, i32) {
    %c0_i32 = arith.constant 0 : i32
    %c0_i32_0 = arith.constant 0 : i32
    %c0_i32_1 = arith.constant 0 : i32
    return %arg0, %c0_i32, %c0_i32_0 : i32, i32, i32
  }
}

</mosaic_0001>

<llo_original>
// kernel: transformer_encoder.1
$region0: #{transformer_encoder.1}
  #allocation0 [shape = 'u32[]', space=smem, size = 0x4, offset = 0x4, fixed_abs, tag = 'smem constant byte address 0x4 - core index']
  #allocation1 [shape = 'u32[144,128]{1,0:T(1,128)}', space=vmem, size = 0x12000, scoped, tag = 'internal scratch']
  #allocation2 [shape = 'f32[8,32]{1,0:T(8,128)}', space=vmem, size = 0x1000, scoped, tag = 'scratch operand']
  #allocation3 [shape = 's32[1]{0}', space=sflag, size = 0x4, scoped, tag = 'scoped memory for transformer_encoder.1']
  #allocation4 [shape = 'u8[512]{0}', space=smem, size = 0x200, scoped, tag = 'prefetched SMEM operand 0']
  %s0 = inlined_call_operand.vmem [shape: s32[2], index: 0, kind: input, shape index: {}]
  %s1 = inlined_call_operand.vmem [shape: f32[2,8,32], index: 1, kind: input, shape index: {}]
  %s2 = inlined_call_operand.vmem [shape: f32[2,8,32], index: 2, kind: input, shape index: {}]
  %s3 = inlined_call_operand.vmem [shape: f32[2,8,32], index: 3, kind: input, shape index: {}]
  %s4 = inlined_call_operand.vmem [shape: f32[12,32,8], index: 4, kind: input, shape index: {}]
  %s5 = inlined_call_operand.vmem [shape: f32[96,32], index: 5, kind: input, shape index: {}]
  %s6 = inlined_call_operand.vmem [shape: f32[33,64], index: 6, kind: input, shape index: {}]
  %s7 = inlined_call_operand.vmem [shape: f32[5,32], index: 7, kind: input, shape index: {}]
  %s8 = inlined_call_operand.hbm [shape: f32[2,8,32], index: 8, kind: output, shape index: {}]
  %s9 = sld [smem:[#allocation0]]
  $region61: #{transformer_encoder.1} parent=0
    _
  %s11 = ssub.s32 1, %s9
  %s12 = scalar_select 0, %s11, %s9
  %s13 = sshll.u32 %s0, 4
  %s14 = int_to_ptr.vmem [resolvable:$true] %s13
  %16 = dma.vmem_to_smem %s14, 16, [#allocation4], [#allocation3]
  %17 = dma.done [#allocation3], 16
  %18 = sfence
  $region1: #{transformer_encoder.1} parent=0
    #allocation5 [shape = 'u8[8192]{0}', space=vmem, size = 0x2000, scoped, tag = 'output window, operand 0']
    #allocation6 [shape = 's32[2]{0}', space=sflag, size = 0x8, scoped, tag = 'scoped memory for transformer_encoder.1']
    %19 = vsyncpa [#allocation6], 0
    %s20 = scalar_lea.sflag [#allocation6], 1
    %21 = vsyncpa %s20, 0
    loop: start=0, step=1, limit=4
    $region2: #{transformer_encoder.1} parent=1 // loop_pre_header
      _
    $region3: #{transformer_encoder.1} parent=1 // loop_header
      %s23 = sphi 0, %s27
      %p24 = scmp.ge.s32.totalorder %s23, 4
      %s33 = sphi 0, %s35
      %s36 = sphi 0, %s33
      %s37 = sphi 0, %s36
      %s53 = sphi 0, %s37
      %s59 = sphi 0, %s61
      %s62 = sphi 0, %s59
      %s63 = sphi 0, %s62
      %s79 = sphi 0, %s63
      %s85 = sphi 0, %s87
      %s88 = sphi 0, %s85
      %s89 = sphi 0, %s88
      %s105 = sphi 0, %s89
      %s109 = sphi 0, %s109
      %s111 = sphi 0, %s109
      %s112 = sphi 0, %s111
      %s126 = sphi 0, %s112
      %s130 = sphi 0, %s130
      %s132 = sphi 0, %s130
      %s133 = sphi 0, %s132
      %s147 = sphi 0, %s133
      %s151 = sphi 0, %s151
      %s153 = sphi 0, %s151
      %s154 = sphi 0, %s153
      %s168 = sphi 0, %s154
      %s172 = sphi 0, %s172
      %s174 = sphi 0, %s172
      %s175 = sphi 0, %s174
      %s189 = sphi 0, %s175
      %s195 = sphi 0, %s197
      %s198 = sphi 0, %s195
      %s199 = sphi 0, %s198
      %s215 = sphi 0, %s199
    $region4: #{transformer_encoder.1} parent=1 // loop_header_branch
      %26 = sbr.rel (%p24) target = $region8
    $region5: #{transformer_encoder.1} parent=1 // loop_body
      %s28 = ssub.s32 %s23, 1
      %s29 = ssub.s32 %s23, 2
      %s30 = sadd.s32 %s23, 1
      %s31 = ssub.s32 %s23, %s30
      %p32 = scmp.eq.s32.totalorder %s31, 0
      %s34 = sadd.s32 %s33, 1
      %s35 = scalar_select %p32, %s33, %s34
      %p38 = pneg %p32
      %p39 = scmp.eq.s32.totalorder %s23, 1
      %p40 = por %p38, %p39
      %p41 = scmp.ne.s32.totalorder %s33, %s36
      %p42 = scmp.eq.s32.totalorder %s23, 0
      %p43 = por %p41, %p42
      %p44 = scmp.ne.s32.totalorder %s33, %s36
      %p45 = scmp.eq.s32.totalorder %s28, 1
      %p46 = por %p44, %p45
      %p47 = scmp.ne.s32.totalorder %s36, %s37
      %p48 = scmp.eq.s32.totalorder %s28, 0
      %p49 = por %p47, %p48
      %p50 = scmp.ne.s32.totalorder %s36, %s37
      %p51 = scmp.eq.s32.totalorder %s29, 1
      %p52 = por %p50, %p51
      %p54 = scmp.ne.s32.totalorder %s37, %s53
      %p55 = scmp.eq.s32.totalorder %s29, 0
      %p56 = por %p54, %p55
      %s57 = ssub.s32 %s23, %s30
      %p58 = scmp.eq.s32.totalorder %s57, 0
      %s60 = sadd.s32 %s59, 1
      %s61 = scalar_select %p58, %s59, %s60
      %p64 = pneg %p58
      %p65 = scmp.eq.s32.totalorder %s23, 1
      %p66 = por %p64, %p65
      %p67 = scmp.ne.s32.totalorder %s59, %s62
      %p68 = scmp.eq.s32.totalorder %s23, 0
      %p69 = por %p67, %p68
      %p70 = scmp.ne.s32.totalorder %s59, %s62
      %p71 = scmp.eq.s32.totalorder %s28, 1
      %p72 = por %p70, %p71
      %p73 = scmp.ne.s32.totalorder %s62, %s63
      %p74 = scmp.eq.s32.totalorder %s28, 0
      %p75 = por %p73, %p74
      %p76 = scmp.ne.s32.totalorder %s62, %s63
      %p77 = scmp.eq.s32.totalorder %s29, 1
      %p78 = por %p76, %p77
      %p80 = scmp.ne.s32.totalorder %s63, %s79
      %p81 = scmp.eq.s32.totalorder %s29, 0
      %p82 = por %p80, %p81
      %s83 = ssub.s32 %s23, %s30
      %p84 = scmp.eq.s32.totalorder %s83, 0
      %s86 = sadd.s32 %s85, 1
      %s87 = scalar_select %p84, %s85, %s86
      %p90 = pneg %p84
      %p91 = scmp.eq.s32.totalorder %s23, 1
      %p92 = por %p90, %p91
      %p93 = scmp.ne.s32.totalorder %s85, %s88
      %p94 = scmp.eq.s32.totalorder %s23, 0
      %p95 = por %p93, %p94
      %p96 = scmp.ne.s32.totalorder %s85, %s88
      %p97 = scmp.eq.s32.totalorder %s28, 1
      %p98 = por %p96, %p97
      %p99 = scmp.ne.s32.totalorder %s88, %s89
      %p100 = scmp.eq.s32.totalorder %s28, 0
      %p101 = por %p99, %p100
      %p102 = scmp.ne.s32.totalorder %s88, %s89
      %p103 = scmp.eq.s32.totalorder %s29, 1
      %p104 = por %p102, %p103
      %p106 = scmp.ne.s32.totalorder %s89, %s105
      %p107 = scmp.eq.s32.totalorder %s29, 0
      %p108 = por %p106, %p107
      %s110 = sadd.s32 %s109, 1
      %p113 = scmp.eq.s32.totalorder %s23, 1
      %p114 = scmp.ne.s32.totalorder %s109, %s111
      %p115 = scmp.eq.s32.totalorder %s23, 0
      %p116 = por %p114, %p115
      %p117 = scmp.ne.s32.totalorder %s109, %s111
      %p118 = scmp.eq.s32.totalorder %s28, 1
      %p119 = por %p117, %p118
      %p120 = scmp.ne.s32.totalorder %s111, %s112
      %p121 = scmp.eq.s32.totalorder %s28, 0
      %p122 = por %p120, %p121
      %p123 = scmp.ne.s32.totalorder %s111, %s112
      %p124 = scmp.eq.s32.totalorder %s29, 1
      %p125 = por %p123, %p124
      %p127 = scmp.ne.s32.totalorder %s112, %s126
      %p128 = scmp.eq.s32.totalorder %s29, 0
      %p129 = por %p127, %p128
      %s131 = sadd.s32 %s130, 1
      %p134 = scmp.eq.s32.totalorder %s23, 1
      %p135 = scmp.ne.s32.totalorder %s130, %s132
      %p136 = scmp.eq.s32.totalorder %s23, 0
      %p137 = por %p135, %p136
      %p138 = scmp.ne.s32.totalorder %s130, %s132
      %p139 = scmp.eq.s32.totalorder %s28, 1
      %p140 = por %p138, %p139
      %p141 = scmp.ne.s32.totalorder %s132, %s133
      %p142 = scmp.eq.s32.totalorder %s28, 0
      %p143 = por %p141, %p142
      %p144 = scmp.ne.s32.totalorder %s132, %s133
      %p145 = scmp.eq.s32.totalorder %s29, 1
      %p146 = por %p144, %p145
      %p148 = scmp.ne.s32.totalorder %s133, %s147
      %p149 = scmp.eq.s32.totalorder %s29, 0
      %p150 = por %p148, %p149
      %s152 = sadd.s32 %s151, 1
      %p155 = scmp.eq.s32.totalorder %s23, 1
      %p156 = scmp.ne.s32.totalorder %s151, %s153
      %p157 = scmp.eq.s32.totalorder %s23, 0
      %p158 = por %p156, %p157
      %p159 = scmp.ne.s32.totalorder %s151, %s153
      %p160 = scmp.eq.s32.totalorder %s28, 1
      %p161 = por %p159, %p160
      %p162 = scmp.ne.s32.totalorder %s153, %s154
      %p163 = scmp.eq.s32.totalorder %s28, 0
      %p164 = por %p162, %p163
      %p165 = scmp.ne.s32.totalorder %s153, %s154
      %p166 = scmp.eq.s32.totalorder %s29, 1
      %p167 = por %p165, %p166
      %p169 = scmp.ne.s32.totalorder %s154, %s168
      %p170 = scmp.eq.s32.totalorder %s29, 0
      %p171 = por %p169, %p170
      %s173 = sadd.s32 %s172, 1
      %p176 = scmp.eq.s32.totalorder %s23, 1
      %p177 = scmp.ne.s32.totalorder %s172, %s174
      %p178 = scmp.eq.s32.totalorder %s23, 0
      %p179 = por %p177, %p178
      %p180 = scmp.ne.s32.totalorder %s172, %s174
      %p181 = scmp.eq.s32.totalorder %s28, 1
      %p182 = por %p180, %p181
      %p183 = scmp.ne.s32.totalorder %s174, %s175
      %p184 = scmp.eq.s32.totalorder %s28, 0
      %p185 = por %p183, %p184
      %p186 = scmp.ne.s32.totalorder %s174, %s175
      %p187 = scmp.eq.s32.totalorder %s29, 1
      %p188 = por %p186, %p187
      %p190 = scmp.ne.s32.totalorder %s175, %s189
      %p191 = scmp.eq.s32.totalorder %s29, 0
      %p192 = por %p190, %p191
      %s193 = ssub.s32 %s23, %s30
      %p194 = scmp.eq.s32.totalorder %s193, 0
      %s196 = sadd.s32 %s195, 1
      %s197 = scalar_select %p194, %s195, %s196
      %p200 = pneg %p194
      %p201 = scmp.eq.s32.totalorder %s23, 1
      %p202 = por %p200, %p201
      %p203 = scmp.ne.s32.totalorder %s195, %s198
      %p204 = scmp.eq.s32.totalorder %s23, 0
      %p205 = por %p203, %p204
      %p206 = scmp.ne.s32.totalorder %s195, %s198
      %p207 = scmp.eq.s32.totalorder %s28, 1
      %p208 = por %p206, %p207
      %p209 = scmp.ne.s32.totalorder %s198, %s199
      %p210 = scmp.eq.s32.totalorder %s28, 0
      %p211 = por %p209, %p210
      %p212 = scmp.ne.s32.totalorder %s198, %s199
      %p213 = scmp.eq.s32.totalorder %s29, 1
      %p214 = por %p212, %p213
      %p216 = scmp.ne.s32.totalorder %s199, %s215
      %p217 = scmp.eq.s32.totalorder %s29, 0
      %p218 = por %p216, %p217
      %p219 = scmp.le.s32.totalorder 1, %s23
      %p220 = scmp.lt.s32.totalorder %s23, 3
      %p221 = pnand %p219, %p220
      %p222 = pneg %p221
      // Predicated region
      $region9: #{transformer_encoder.1} parent=5 // pred_check
        _
      $region10: #{transformer_encoder.1} parent=5 // pred_check_branch
        %224 = sbr.rel (%p221) target = $region12
      $region11: #{transformer_encoder.1} parent=5 // pred_region
        %s225 = ssub.s32 %s23, 1
        // Predicated region
        $region13: #{transformer_encoder.1} parent=11 // pred_check
          %p226 = pneg %p122
        $region14: #{transformer_encoder.1} parent=11 // pred_check_branch
          %228 = sbr.rel (%p226) target = $region16
        $region15: #{transformer_encoder.1} parent=11 // pred_region
          _
        $region16: #{transformer_encoder.1} parent=11 // pred_fallthru
          _
        // Predicated region
        $region17: #{transformer_encoder.1} parent=11 // pred_check
          %p229 = pneg %p143
        $region18: #{transformer_encoder.1} parent=11 // pred_check_branch
          %231 = sbr.rel (%p229) target = $region20
        $region19: #{transformer_encoder.1} parent=11 // pred_region
          _
        $region20: #{transformer_encoder.1} parent=11 // pred_fallthru
          _
        // Predicated region
        $region21: #{transformer_encoder.1} parent=11 // pred_check
          %p232 = pneg %p164
        $region22: #{transformer_encoder.1} parent=11 // pred_check_branch
          %234 = sbr.rel (%p232) target = $region24
        $region23: #{transformer_encoder.1} parent=11 // pred_region
          _
        $region24: #{transformer_encoder.1} parent=11 // pred_fallthru
          _
        // Predicated region
        $region25: #{transformer_encoder.1} parent=11 // pred_check
          %p235 = pneg %p185
        $region26: #{transformer_encoder.1} parent=11 // pred_check_branch
          %237 = sbr.rel (%p235) target = $region28
        $region27: #{transformer_encoder.1} parent=11 // pred_region
          _
        $region28: #{transformer_encoder.1} parent=11 // pred_fallthru
          _
      $region12: #{transformer_encoder.1} parent=5 // pred_fallthru
        _
      %p238 = scmp.lt.s32.totalorder %s23, 2
      // Predicated region
      $region29: #{transformer_encoder.1} parent=5 // pred_check
        %p239 = pneg %p238
      $region30: #{transformer_encoder.1} parent=5 // pred_check_branch
        %241 = sbr.rel (%p239) target = $region32
      $region31: #{transformer_encoder.1} parent=5 // pred_region
        // Predicated region
        $region33: #{transformer_encoder.1} parent=31 // pred_check
          %p242 = pneg %p43
        $region34: #{transformer_encoder.1} parent=31 // pred_check_branch
          %244 = sbr.rel (%p242) target = $region36
        $region35: #{transformer_encoder.1} parent=31 // pred_region
          %p245 = scmp.lt.s32.totalorder %s23, 1
          %s246 = scalar_select %p245, %s23, 1
          %s247 = smul.addr %s246, 8
          %s248 = scalar_lea.vmem %s1, %s247
        $region36: #{transformer_encoder.1} parent=31 // pred_fallthru
          _
        // Predicated region
        $region37: #{transformer_encoder.1} parent=31 // pred_check
          %p249 = pneg %p69
        $region38: #{transformer_encoder.1} parent=31 // pred_check_branch
          %251 = sbr.rel (%p249) target = $region40
        $region39: #{transformer_encoder.1} parent=31 // pred_region
          %p252 = scmp.lt.s32.totalorder %s23, 1
          %s253 = scalar_select %p252, %s23, 1
          %s254 = smul.addr %s253, 8
          %s255 = scalar_lea.vmem %s2, %s254
        $region40: #{transformer_encoder.1} parent=31 // pred_fallthru
          _
        // Predicated region
        $region41: #{transformer_encoder.1} parent=31 // pred_check
          %p256 = pneg %p95
        $region42: #{transformer_encoder.1} parent=31 // pred_check_branch
          %258 = sbr.rel (%p256) target = $region44
        $region43: #{transformer_encoder.1} parent=31 // pred_region
          %p259 = scmp.lt.s32.totalorder %s23, 1
          %s260 = scalar_select %p259, %s23, 1
          %s261 = smul.addr %s260, 8
          %s262 = scalar_lea.vmem %s3, %s261
        $region44: #{transformer_encoder.1} parent=31 // pred_fallthru
          _
      $region32: #{transformer_encoder.1} parent=5 // pred_fallthru
        _
      %p263 = scmp.le.s32.totalorder 1, %s23
      %p264 = scmp.lt.s32.totalorder %s23, 3
      %p265 = pnand %p263, %p264
      %p266 = pneg %p265
      // Predicated region
      $region45: #{transformer_encoder.1} parent=5 // pred_check
        _
      $region46: #{transformer_encoder.1} parent=5 // pred_check_branch
        %268 = sbr.rel (%p265) target = $region48
      $region47: #{transformer_encoder.1} parent=5 // pred_region
        %s269 = ssub.s32 %s23, 1
        %p270 = scmp.lt.s32.totalorder %s28, 1
        %s271 = scalar_select %p270, %s28, 1
        %s272 = smul.addr %s271, 8
        %s273 = scalar_lea.vmem %s1, %s272
        %p274 = pneg %p49
        %p275 = pneg %p46
        %p276 = scmp.lt.s32.totalorder %s28, 1
        %s277 = scalar_select %p276, %s28, 1
        %s278 = smul.addr %s277, 8
        %s279 = scalar_lea.vmem %s2, %s278
        %p280 = pneg %p75
        %p281 = pneg %p72
        %p282 = scmp.lt.s32.totalorder %s28, 1
        %s283 = scalar_select %p282, %s28, 1
        %s284 = smul.addr %s283, 8
        %s285 = scalar_lea.vmem %s3, %s284
        %p286 = pneg %p101
        %p287 = pneg %p98
        %p288 = pneg %p122
        %p289 = pneg %p119
        %p290 = pneg %p143
        %p291 = pneg %p140
        %p292 = pneg %p164
        %p293 = pneg %p161
        %p294 = pneg %p185
        %p295 = pneg %p182
        %p296 = pneg %p211
        %p297 = pneg %p208
        %s298 = sand.u32 %s198, 1
        %s299 = scalar_lea.sflag [#allocation6], %s298
        %s300 = sand.u32 %s198, 1
        %s301 = smul.addr %s300, 8
        %s302 = scalar_lea.vmem [#allocation5], %s301
        %p303 = scmp.lt.s32.totalorder %s28, 1
        %s304 = scalar_select %p303, %s28, 1
        %s305 = smul.addr %s304, 8
        %s306 = scalar_lea.vmem %s1, %s305
        %p307 = scmp.lt.s32.totalorder %s28, 1
        %s308 = scalar_select %p307, %s28, 1
        %s309 = smul.addr %s308, 8
        %s310 = scalar_lea.vmem %s2, %s309
        %p311 = scmp.lt.s32.totalorder %s28, 1
        %s312 = scalar_select %p311, %s28, 1
        %s313 = smul.addr %s312, 8
        %s314 = scalar_lea.vmem %s3, %s313
        %s315 = sld [smem:[#allocation4 + %s28]]
        %v316 = vld [vmem:[%s306] sm:$0xff]
        %v317 = vld [vmem:[%s310] sm:$0xff]
        %v318 = vld [vmem:[%s314] sm:$0xff]
        %v319 = vlaneseq
        %v320 = vand.u32 %v319, 127
        %v321 = vstv %s315
        %vm322 = vcmp.lt.s32.totalorder %v320, %v321
        %v323 = vld [vmem:[%s4] sm:$0xff]
        %v324 = vld [vmem:[%s4 + $0x8] sm:$0xff]
        %v325 = vld [vmem:[%s4 + $0x10] sm:$0xff]
        %v326 = vld [vmem:[%s4 + $0x18] sm:$0xff]
        %vm327 = vcmask 261120
        %v329 = vsel %vm327, %v316, 0
        %331 = vmatprep.subr.mxu0 0.0
        %332 = vmatpush1.msra.mxu0 %v323
        %333 = vmatprep.subr.mxu0 0.0
        %334 = vmatpush1.msra.mxu0 %v324
        %335 = vmatprep.subr.mxu0 0.0
        %336 = vmatpush1.msra.mxu0 %v325
        %337 = vmatprep.subr.mxu0 0.0
        %338 = vmatpush1.msra.mxu0 %v326
        %339 = vmatprep.subr.mxu0 0.0
        %340 = vmatpush1.msra.mxu0 0.0
        %341 = vmatprep.subr.mxu0 0.0
        %342 = vmatpush1.msra.mxu0 0.0
        %343 = vmatprep.subr.mxu0 0.0
        %344 = vmatpush1.msra.mxu0 0.0
        %345 = vmatprep.subr.mxu0 0.0
        %346 = vmatpush1.msra.mxu0 0.0
        %347 = vmatprep.subr.mxu0 0.0
        %348 = vmatpush1.msra.mxu0 0.0
        %349 = vmatprep.subr.mxu0 0.0
        %350 = vmatpush1.msra.mxu0 0.0
        %351 = vmatprep.subr.mxu0 0.0
        %352 = vmatpush1.msra.mxu0 0.0
        %353 = vmatprep.subr.mxu0 0.0
        %354 = vmatpush1.msra.mxu0 0.0
        %355 = vmatprep.subr.mxu0 0.0
        %356 = vmatpush1.msra.mxu0 0.0
        %357 = vmatprep.subr.mxu0 0.0
        %358 = vmatpush1.msra.mxu0 0.0
        %359 = vmatprep.subr.mxu0 0.0
        %360 = vmatpush1.msra.mxu0 0.0
        %361 = vmatprep.subr.mxu0 0.0
        %362 = vmatpush1.msra.mxu0 0.0
        %363 = vmatprep.subr.mxu0 0.0
        %364 = vmatpush1.msra.mxu0 0.0
        %365 = vmatprep.subr.mxu0 0.0
        %366 = vmatpush1.msra.mxu0 0.0
        %367 = vmatprep.subr.mxu0 0.0
        %368 = vmatpush1.msra.mxu0 0.0
        %369 = vmatprep.subr.mxu0 0.0
        %370 = vmatpush1.msra.mxu0 0.0
        %371 = vmatprep.subr.mxu0 0.0
        %372 = vmatpush1.msra.mxu0 0.0
        %373 = vmatprep.subr.mxu0 0.0
        %374 = vmatpush1.msra.mxu0 0.0
        %375 = vmatprep.subr.mxu0 0.0
        %376 = vmatpush1.msra.mxu0 0.0
        %377 = vmatprep.subr.mxu0 0.0
        %378 = vmatpush1.msra.mxu0 0.0
        %379 = vmatprep.subr.mxu0 0.0
        %380 = vmatpush1.msra.mxu0 0.0
        %381 = vmatprep.subr.mxu0 0.0
        %382 = vmatpush1.msra.mxu0 0.0
        %383 = vmatprep.subr.mxu0 0.0
        %384 = vmatpush1.msra.mxu0 0.0
        %385 = vmatprep.subr.mxu0 0.0
        %386 = vmatpush1.msra.mxu0 0.0
        %387 = vmatprep.subr.mxu0 0.0
        %388 = vmatpush1.msra.mxu0 0.0
        %389 = vmatprep.subr.mxu0 0.0
        %390 = vmatpush1.msra.mxu0 0.0
        %391 = vmatprep.subr.mxu0 0.0
        %392 = vmatpush1.msra.mxu0 0.0
        %393 = vmatprep.subr.mxu0 0.0
        %394 = vmatpush1.msra.mxu0 0.0
        %395 = vmatprep.mubr.f32.mxu0 0.0
        %396 = vmatmul.mubr.f32.gmra.mrb[0].mxu0 %v329
        %v397 = vpop.f32.mrb[0].mxu0
        %v398 = vadd.f32 0.0, %v397
        %v399 = vpop.f32.mrb[0].mxu0
        %400 = vdwg.mxu0
        %s401 = scalar_lea.vmem %s4, 128
        %v402 = vld [vmem:[%s401] sm:$0xff]
        %v403 = vld [vmem:[%s401 + $0x8] sm:$0xff]
        %v404 = vld [vmem:[%s401 + $0x10] sm:$0xff]
        %v405 = vld [vmem:[%s401 + $0x18] sm:$0xff]
        %v407 = vsel %vm327, %v317, 0
        %409 = vmatprep.subr.mxu0 0.0
        %410 = vmatpush1.msra.mxu0 %v402
        %411 = vmatprep.subr.mxu0 0.0
        %412 = vmatpush1.msra.mxu0 %v403
        %413 = vmatprep.subr.mxu0 0.0
        %414 = vmatpush1.msra.mxu0 %v404
        %415 = vmatprep.subr.mxu0 0.0
        %416 = vmatpush1.msra.mxu0 %v405
        %417 = vmatprep.subr.mxu0 0.0
        %418 = vmatpush1.msra.mxu0 0.0
        %419 = vmatprep.subr.mxu0 0.0
        %420 = vmatpush1.msra.mxu0 0.0
        %421 = vmatprep.subr.mxu0 0.0
        %422 = vmatpush1.msra.mxu0 0.0
        %423 = vmatprep.subr.mxu0 0.0
        %424 = vmatpush1.msra.mxu0 0.0
        %425 = vmatprep.subr.mxu0 0.0
        %426 = vmatpush1.msra.mxu0 0.0
        %427 = vmatprep.subr.mxu0 0.0
        %428 = vmatpush1.msra.mxu0 0.0
        %429 = vmatprep.subr.mxu0 0.0
        %430 = vmatpush1.msra.mxu0 0.0
        %431 = vmatprep.subr.mxu0 0.0
        %432 = vmatpush1.msra.mxu0 0.0
        %433 = vmatprep.subr.mxu0 0.0
        %434 = vmatpush1.msra.mxu0 0.0
        %435 = vmatprep.subr.mxu0 0.0
        %436 = vmatpush1.msra.mxu0 0.0
        %437 = vmatprep.subr.mxu0 0.0
        %438 = vmatpush1.msra.mxu0 0.0
        %439 = vmatprep.subr.mxu0 0.0
        %440 = vmatpush1.msra.mxu0 0.0
        %441 = vmatprep.subr.mxu0 0.0
        %442 = vmatpush1.msra.mxu0 0.0
        %443 = vmatprep.subr.mxu0 0.0
        %444 = vmatpush1.msra.mxu0 0.0
        %445 = vmatprep.subr.mxu0 0.0
        %446 = vmatpush1.msra.mxu0 0.0
        %447 = vmatprep.subr.mxu0 0.0
        %448 = vmatpush1.msra.mxu0 0.0
        %449 = vmatprep.subr.mxu0 0.0
        %450 = vmatpush1.msra.mxu0 0.0
        %451 = vmatprep.subr.mxu0 0.0
        %452 = vmatpush1.msra.mxu0 0.0
        %453 = vmatprep.subr.mxu0 0.0
        %454 = vmatpush1.msra.mxu0 0.0
        %455 = vmatprep.subr.mxu0 0.0
        %456 = vmatpush1.msra.mxu0 0.0
        %457 = vmatprep.subr.mxu0 0.0
        %458 = vmatpush1.msra.mxu0 0.0
        %459 = vmatprep.subr.mxu0 0.0
        %460 = vmatpush1.msra.mxu0 0.0
        %461 = vmatprep.subr.mxu0 0.0
        %462 = vmatpush1.msra.mxu0 0.0
        %463 = vmatprep.subr.mxu0 0.0
        %464 = vmatpush1.msra.mxu0 0.0
        %465 = vmatprep.subr.mxu0 0.0
        %466 = vmatpush1.msra.mxu0 0.0
        %467 = vmatprep.subr.mxu0 0.0
        %468 = vmatpush1.msra.mxu0 0.0
        %469 = vmatprep.subr.mxu0 0.0
        %470 = vmatpush1.msra.mxu0 0.0
        %471 = vmatprep.subr.mxu0 0.0
        %472 = vmatpush1.msra.mxu0 0.0
        %473 = vmatprep.mubr.f32.mxu0 0.0
        %474 = vmatmul.mubr.f32.gmra.mrb[0].mxu0 %v407
        %v475 = vpop.f32.mrb[0].mxu0
        %v476 = vadd.f32 0.0, %v475
        %v477 = vpop.f32.mrb[0].mxu0
        %478 = vdwg.mxu0
        %s479 = scalar_lea.vmem %s4, 256
        %v480 = vld [vmem:[%s479] sm:$0xff]
        %v481 = vld [vmem:[%s479 + $0x8] sm:$0xff]
        %v482 = vld [vmem:[%s479 + $0x10] sm:$0xff]
        %v483 = vld [vmem:[%s479 + $0x18] sm:$0xff]
        %v485 = vsel %vm327, %v318, 0
        %487 = vmatprep.subr.mxu0 0.0
        %488 = vmatpush1.msra.mxu0 %v480
        %489 = vmatprep.subr.mxu0 0.0
        %490 = vmatpush1.msra.mxu0 %v481
        %491 = vmatprep.subr.mxu0 0.0
        %492 = vmatpush1.msra.mxu0 %v482
        %493 = vmatprep.subr.mxu0 0.0
        %494 = vmatpush1.msra.mxu0 %v483
        %495 = vmatprep.subr.mxu0 0.0
        %496 = vmatpush1.msra.mxu0 0.0
        %497 = vmatprep.subr.mxu0 0.0
        %498 = vmatpush1.msra.mxu0 0.0
        %499 = vmatprep.subr.mxu0 0.0
        %500 = vmatpush1.msra.mxu0 0.0
        %501 = vmatprep.subr.mxu0 0.0
        %502 = vmatpush1.msra.mxu0 0.0
        %503 = vmatprep.subr.mxu0 0.0
        %504 = vmatpush1.msra.mxu0 0.0
        %505 = vmatprep.subr.mxu0 0.0
        %506 = vmatpush1.msra.mxu0 0.0
        %507 = vmatprep.subr.mxu0 0.0
        %508 = vmatpush1.msra.mxu0 0.0
        %509 = vmatprep.subr.mxu0 0.0
        %510 = vmatpush1.msra.mxu0 0.0
        %511 = vmatprep.subr.mxu0 0.0
        %512 = vmatpush1.msra.mxu0 0.0
        %513 = vmatprep.subr.mxu0 0.0
        %514 = vmatpush1.msra.mxu0 0.0
        %515 = vmatprep.subr.mxu0 0.0
        %516 = vmatpush1.msra.mxu0 0.0
        %517 = vmatprep.subr.mxu0 0.0
        %518 = vmatpush1.msra.mxu0 0.0
        %519 = vmatprep.subr.mxu0 0.0
        %520 = vmatpush1.msra.mxu0 0.0
        %521 = vmatprep.subr.mxu0 0.0
        %522 = vmatpush1.msra.mxu0 0.0
        %523 = vmatprep.subr.mxu0 0.0
        %524 = vmatpush1.msra.mxu0 0.0
        %525 = vmatprep.subr.mxu0 0.0
        %526 = vmatpush1.msra.mxu0 0.0
        %527 = vmatprep.subr.mxu0 0.0
        %528 = vmatpush1.msra.mxu0 0.0
        %529 = vmatprep.subr.mxu0 0.0
        %530 = vmatpush1.msra.mxu0 0.0
        %531 = vmatprep.subr.mxu0 0.0
        %532 = vmatpush1.msra.mxu0 0.0
        %533 = vmatprep.subr.mxu0 0.0
        %534 = vmatpush1.msra.mxu0 0.0
        %535 = vmatprep.subr.mxu0 0.0
        %536 = vmatpush1.msra.mxu0 0.0
        %537 = vmatprep.subr.mxu0 0.0
        %538 = vmatpush1.msra.mxu0 0.0
        %539 = vmatprep.subr.mxu0 0.0
        %540 = vmatpush1.msra.mxu0 0.0
        %541 = vmatprep.subr.mxu0 0.0
        %542 = vmatpush1.msra.mxu0 0.0
        %543 = vmatprep.subr.mxu0 0.0
        %544 = vmatpush1.msra.mxu0 0.0
        %545 = vmatprep.subr.mxu0 0.0
        %546 = vmatpush1.msra.mxu0 0.0
        %547 = vmatprep.subr.mxu0 0.0
        %548 = vmatpush1.msra.mxu0 0.0
        %549 = vmatprep.subr.mxu0 0.0
        %550 = vmatpush1.msra.mxu0 0.0
        %551 = vmatprep.mubr.f32.mxu0 0.0
        %552 = vmatmul.mubr.f32.gmra.mrb[0].mxu0 %v485
        %v553 = vpop.f32.mrb[0].mxu0
        %v554 = vadd.f32 0.0, %v553
        %v555 = vpop.f32.mrb[0].mxu0
        %556 = vdwg.mxu0
        %vm557 = vcmask 64512
        %v559 = vsel %vm557, %v398, 0
        %v562 = vsel %vm557, %v476, 0
        %564 = vmatprep.subr.mxu0 0.0
        %565 = vmatpush1.xpose.msra.mxu0 %v562
        %566 = vmatprep.subr.mxu0 0.0
        %567 = vmatpush1.xpose.msra.mxu0 0.0
        %568 = vmatprep.subr.mxu0 0.0
        %569 = vmatpush1.xpose.msra.mxu0 0.0
        %570 = vmatprep.subr.mxu0 0.0
        %571 = vmatpush1.xpose.msra.mxu0 0.0
        %572 = vmatprep.subr.mxu0 0.0
        %573 = vmatpush1.xpose.msra.mxu0 0.0
        %574 = vmatprep.subr.mxu0 0.0
        %575 = vmatpush1.xpose.msra.mxu0 0.0
        %576 = vmatprep.subr.mxu0 0.0
        %577 = vmatpush1.xpose.msra.mxu0 0.0
        %578 = vmatprep.subr.mxu0 0.0
        %579 = vmatpush1.xpose.msra.mxu0 0.0
        %580 = vmatprep.subr.mxu0 0.0
        %581 = vmatpush1.xpose.msra.mxu0 0.0
        %582 = vmatprep.subr.mxu0 0.0
        %583 = vmatpush1.xpose.msra.mxu0 0.0
        %584 = vmatprep.subr.mxu0 0.0
        %585 = vmatpush1.xpose.msra.mxu0 0.0
        %586 = vmatprep.subr.mxu0 0.0
        %587 = vmatpush1.xpose.msra.mxu0 0.0
        %588 = vmatprep.subr.mxu0 0.0
        %589 = vmatpush1.xpose.msra.mxu0 0.0
        %590 = vmatprep.subr.mxu0 0.0
        %591 = vmatpush1.xpose.msra.mxu0 0.0
        %592 = vmatprep.subr.mxu0 0.0
        %593 = vmatpush1.xpose.msra.mxu0 0.0
        %594 = vmatprep.subr.mxu0 0.0
        %595 = vmatpush1.xpose.msra.mxu0 0.0
        %596 = vmatprep.subr.mxu0 0.0
        %597 = vmatpush1.xpose.msra.mxu0 0.0
        %598 = vmatprep.subr.mxu0 0.0
        %599 = vmatpush1.xpose.msra.mxu0 0.0
        %600 = vmatprep.subr.mxu0 0.0
        %601 = vmatpush1.xpose.msra.mxu0 0.0
        %602 = vmatprep.subr.mxu0 0.0
        %603 = vmatpush1.xpose.msra.mxu0 0.0
        %604 = vmatprep.subr.mxu0 0.0
        %605 = vmatpush1.xpose.msra.mxu0 0.0
        %606 = vmatprep.subr.mxu0 0.0
        %607 = vmatpush1.xpose.msra.mxu0 0.0
        %608 = vmatprep.subr.mxu0 0.0
        %609 = vmatpush1.xpose.msra.mxu0 0.0
        %610 = vmatprep.subr.mxu0 0.0
        %611 = vmatpush1.xpose.msra.mxu0 0.0
        %612 = vmatprep.subr.mxu0 0.0
        %613 = vmatpush1.xpose.msra.mxu0 0.0
        %614 = vmatprep.subr.mxu0 0.0
        %615 = vmatpush1.xpose.msra.mxu0 0.0
        %616 = vmatprep.subr.mxu0 0.0
        %617 = vmatpush1.xpose.msra.mxu0 0.0
        %618 = vmatprep.subr.mxu0 0.0
        %619 = vmatpush1.xpose.msra.mxu0 0.0
        %620 = vmatprep.subr.mxu0 0.0
        %621 = vmatpush1.xpose.msra.mxu0 0.0
        %622 = vmatprep.subr.mxu0 0.0
        %623 = vmatpush1.xpose.msra.mxu0 0.0
        %624 = vmatprep.subr.mxu0 0.0
        %625 = vmatpush1.xpose.msra.mxu0 0.0
        %626 = vmatprep.subr.mxu0 0.0
        %627 = vmatpush1.xpose.msra.mxu0 0.0
        %628 = vmatprep.mubr.f32.mxu0 0.0
        %629 = vmatmul.mubr.f32.gmra.mrb[0].mxu0 %v559
        %v630 = vpop.f32.mrb[0].mxu0
        %v631 = vadd.f32 0.0, %v630
        %v632 = vpop.f32.mrb[0].mxu0
        %633 = vdwg.mxu0
        %v634 = vmul.f32 %v631, 0.35355338
        %v635 = vsel %vm322, %v634, -1000000.0
        %v636 = vsel %vm557, %v635, -inf
        %637 = vmax.xlane.f32.xlu0 %v636
        %v638 = vpop.xlane.xlu0 %637
        %v639 = vsub.f32 %v635, %v638
        %v640 = vmul.f32 %v639, 1.442695
        %v641 = vpow.pop %v640
        %v642 = vsel %vm557, %v641, 0.0
        %643 = vadd.xlane.f32.xlu0 %v642
        %v644 = vpop.xlane.xlu0 %643
        %v645 = vrcp.pop %v644
        %v646 = vmul.f32 %v641, %v645
        %v648 = vsel %vm557, %v646, 0
        %650 = vmatprep.subr.mxu0 0.0
        %651 = vmatpush1.msra.mxu0 %v554
        %652 = vmatprep.subr.mxu0 0.0
        %653 = vmatpush1.msra.mxu0 0.0
        %654 = vmatprep.subr.mxu0 0.0
        %655 = vmatpush1.msra.mxu0 0.0
        %656 = vmatprep.subr.mxu0 0.0
        %657 = vmatpush1.msra.mxu0 0.0
        %658 = vmatprep.subr.mxu0 0.0
        %659 = vmatpush1.msra.mxu0 0.0
        %660 = vmatprep.subr.mxu0 0.0
        %661 = vmatpush1.msra.mxu0 0.0
        %662 = vmatprep.subr.mxu0 0.0
        %663 = vmatpush1.msra.mxu0 0.0
        %664 = vmatprep.subr.mxu0 0.0
        %665 = vmatpush1.msra.mxu0 0.0
        %666 = vmatprep.subr.mxu0 0.0
        %667 = vmatpush1.msra.mxu0 0.0
        %668 = vmatprep.subr.mxu0 0.0
        %669 = vmatpush1.msra.mxu0 0.0
        %670 = vmatprep.subr.mxu0 0.0
        %671 = vmatpush1.msra.mxu0 0.0
        %672 = vmatprep.subr.mxu0 0.0
        %673 = vmatpush1.msra.mxu0 0.0
        %674 = vmatprep.subr.mxu0 0.0
        %675 = vmatpush1.msra.mxu0 0.0
        %676 = vmatprep.subr.mxu0 0.0
        %677 = vmatpush1.msra.mxu0 0.0
        %678 = vmatprep.subr.mxu0 0.0
        %679 = vmatpush1.msra.mxu0 0.0
        %680 = vmatprep.subr.mxu0 0.0
        %681 = vmatpush1.msra.mxu0 0.0
        %682 = vmatprep.subr.mxu0 0.0
        %683 = vmatpush1.msra.mxu0 0.0
        %684 = vmatprep.subr.mxu0 0.0
        %685 = vmatpush1.msra.mxu0 0.0
        %686 = vmatprep.subr.mxu0 0.0
        %687 = vmatpush1.msra.mxu0 0.0
        %688 = vmatprep.subr.mxu0 0.0
        %689 = vmatpush1.msra.mxu0 0.0
        %690 = vmatprep.subr.mxu0 0.0
        %691 = vmatpush1.msra.mxu0 0.0
        %692 = vmatprep.subr.mxu0 0.0
        %693 = vmatpush1.msra.mxu0 0.0
        %694 = vmatprep.subr.mxu0 0.0
        %695 = vmatpush1.msra.mxu0 0.0
        %696 = vmatprep.subr.mxu0 0.0
        %697 = vmatpush1.msra.mxu0 0.0
        %698 = vmatprep.subr.mxu0 0.0
        %699 = vmatpush1.msra.mxu0 0.0
        %700 = vmatprep.subr.mxu0 0.0
        %701 = vmatpush1.msra.mxu0 0.0
        %702 = vmatprep.subr.mxu0 0.0
        %703 = vmatpush1.msra.mxu0 0.0
        %704 = vmatprep.subr.mxu0 0.0
        %705 = vmatpush1.msra.mxu0 0.0
        %706 = vmatprep.subr.mxu0 0.0
        %707 = vmatpush1.msra.mxu0 0.0
        %708 = vmatprep.subr.mxu0 0.0
        %709 = vmatpush1.msra.mxu0 0.0
        %710 = vmatprep.subr.mxu0 0.0
        %711 = vmatpush1.msra.mxu0 0.0
        %712 = vmatprep.subr.mxu0 0.0
        %713 = vmatpush1.msra.mxu0 0.0
        %714 = vmatprep.mubr.f32.mxu0 0.0
        %715 = vmatmul.mubr.f32.gmra.mrb[0].mxu0 %v648
        %v716 = vpop.f32.mrb[0].mxu0
        %v717 = vadd.f32 0.0, %v716
        %v718 = vpop.f32.mrb[0].mxu0
        %719 = vdwg.mxu0
        %720 = vst.msk [vmem:[#allocation2] sm:$0xff] %vm557, %v717
        %s721 = scalar_lea.vmem %s4, 32
        %v722 = vld [vmem:[%s721] sm:$0xff]
        %v723 = vld [vmem:[%s721 + $0x8] sm:$0xff]
        %v724 = vld [vmem:[%s721 + $0x10] sm:$0xff]
        %v725 = vld [vmem:[%s721 + $0x18] sm:$0xff]
        %726 = vmatprep.subr.mxu0 0.0
        %727 = vmatpush1.msra.mxu0 %v722
        %728 = vmatprep.subr.mxu0 0.0
        %729 = vmatpush1.msra.mxu0 %v723
        %730 = vmatprep.subr.mxu0 0.0
        %731 = vmatpush1.msra.mxu0 %v724
        %732 = vmatprep.subr.mxu0 0.0
        %733 = vmatpush1.msra.mxu0 %v725
        %734 = vmatprep.subr.mxu0 0.0
        %735 = vmatpush1.msra.mxu0 0.0
        %736 = vmatprep.subr.mxu0 0.0
        %737 = vmatpush1.msra.mxu0 0.0
        %738 = vmatprep.subr.mxu0 0.0
        %739 = vmatpush1.msra.mxu0 0.0
        %740 = vmatprep.subr.mxu0 0.0
        %741 = vmatpush1.msra.mxu0 0.0
        %742 = vmatprep.subr.mxu0 0.0
        %743 = vmatpush1.msra.mxu0 0.0
        %744 = vmatprep.subr.mxu0 0.0
        %745 = vmatpush1.msra.mxu0 0.0
        %746 = vmatprep.subr.mxu0 0.0
        %747 = vmatpush1.msra.mxu0 0.0
        %748 = vmatprep.subr.mxu0 0.0
        %749 = vmatpush1.msra.mxu0 0.0
        %750 = vmatprep.subr.mxu0 0.0
        %751 = vmatpush1.msra.mxu0 0.0
        %752 = vmatprep.subr.mxu0 0.0
        %753 = vmatpush1.msra.mxu0 0.0
        %754 = vmatprep.subr.mxu0 0.0
        %755 = vmatpush1.msra.mxu0 0.0
        %756 = vmatprep.subr.mxu0 0.0
        %757 = vmatpush1.msra.mxu0 0.0
        %758 = vmatprep.subr.mxu0 0.0
        %759 = vmatpush1.msra.mxu0 0.0
        %760 = vmatprep.subr.mxu0 0.0
        %761 = vmatpush1.msra.mxu0 0.0
        %762 = vmatprep.subr.mxu0 0.0
        %763 = vmatpush1.msra.mxu0 0.0
        %764 = vmatprep.subr.mxu0 0.0
        %765 = vmatpush1.msra.mxu0 0.0
        %766 = vmatprep.subr.mxu0 0.0
        %767 = vmatpush1.msra.mxu0 0.0
        %768 = vmatprep.subr.mxu0 0.0
        %769 = vmatpush1.msra.mxu0 0.0
        %770 = vmatprep.subr.mxu0 0.0
        %771 = vmatpush1.msra.mxu0 0.0
        %772 = vmatprep.subr.mxu0 0.0
        %773 = vmatpush1.msra.mxu0 0.0
        %774 = vmatprep.subr.mxu0 0.0
        %775 = vmatpush1.msra.mxu0 0.0
        %776 = vmatprep.subr.mxu0 0.0
        %777 = vmatpush1.msra.mxu0 0.0
        %778 = vmatprep.subr.mxu0 0.0
        %779 = vmatpush1.msra.mxu0 0.0
        %780 = vmatprep.subr.mxu0 0.0
        %781 = vmatpush1.msra.mxu0 0.0
        %782 = vmatprep.subr.mxu0 0.0
        %783 = vmatpush1.msra.mxu0 0.0
        %784 = vmatprep.subr.mxu0 0.0
        %785 = vmatpush1.msra.mxu0 0.0
        %786 = vmatprep.subr.mxu0 0.0
        %787 = vmatpush1.msra.mxu0 0.0
        %788 = vmatprep.subr.mxu0 0.0
        %789 = vmatpush1.msra.mxu0 0.0
        %790 = vmatprep.mubr.f32.mxu0 0.0
        %791 = vmatmul.mubr.f32.gmra.mrb[0].mxu0 %v329
        %v792 = vpop.f32.mrb[0].mxu0
        %v793 = vadd.f32 0.0, %v792
        %v794 = vpop.f32.mrb[0].mxu0
        %795 = vdwg.mxu0
        %s796 = scalar_lea.vmem %s4, 160
        %v797 = vld [vmem:[%s796] sm:$0xff]
        %v798 = vld [vmem:[%s796 + $0x8] sm:$0xff]
        %v799 = vld [vmem:[%s796 + $0x10] sm:$0xff]
        %v800 = vld [vmem:[%s796 + $0x18] sm:$0xff]
        %801 = vmatprep.subr.mxu0 0.0
        %802 = vmatpush1.msra.mxu0 %v797
        %803 = vmatprep.subr.mxu0 0.0
        %804 = vmatpush1.msra.mxu0 %v798
        %805 = vmatprep.subr.mxu0 0.0
        %806 = vmatpush1.msra.mxu0 %v799
        %807 = vmatprep.subr.mxu0 0.0
        %808 = vmatpush1.msra.mxu0 %v800
        %809 = vmatprep.subr.mxu0 0.0
        %810 = vmatpush1.msra.mxu0 0.0
        %811 = vmatprep.subr.mxu0 0.0
        %812 = vmatpush1.msra.mxu0 0.0
        %813 = vmatprep.subr.mxu0 0.0
        %814 = vmatpush1.msra.mxu0 0.0
        %815 = vmatprep.subr.mxu0 0.0
        %816 = vmatpush1.msra.mxu0 0.0
        %817 = vmatprep.subr.mxu0 0.0
        %818 = vmatpush1.msra.mxu0 0.0
        %819 = vmatprep.subr.mxu0 0.0
        %820 = vmatpush1.msra.mxu0 0.0
        %821 = vmatprep.subr.mxu0 0.0
        %822 = vmatpush1.msra.mxu0 0.0
        %823 = vmatprep.subr.mxu0 0.0
        %824 = vmatpush1.msra.mxu0 0.0
        %825 = vmatprep.subr.mxu0 0.0
        %826 = vmatpush1.msra.mxu0 0.0
        %827 = vmatprep.subr.mxu0 0.0
        %828 = vmatpush1.msra.mxu0 0.0
        %829 = vmatprep.subr.mxu0 0.0
        %830 = vmatpush1.msra.mxu0 0.0
        %831 = vmatprep.subr.mxu0 0.0
        %832 = vmatpush1.msra.mxu0 0.0
        %833 = vmatprep.subr.mxu0 0.0
        %834 = vmatpush1.msra.mxu0 0.0
        %835 = vmatprep.subr.mxu0 0.0
        %836 = vmatpush1.msra.mxu0 0.0
        %837 = vmatprep.subr.mxu0 0.0
        %838 = vmatpush1.msra.mxu0 0.0
        %839 = vmatprep.subr.mxu0 0.0
        %840 = vmatpush1.msra.mxu0 0.0
        %841 = vmatprep.subr.mxu0 0.0
        %842 = vmatpush1.msra.mxu0 0.0
        %843 = vmatprep.subr.mxu0 0.0
        %844 = vmatpush1.msra.mxu0 0.0
        %845 = vmatprep.subr.mxu0 0.0
        %846 = vmatpush1.msra.mxu0 0.0
        %847 = vmatprep.subr.mxu0 0.0
        %848 = vmatpush1.msra.mxu0 0.0
        %849 = vmatprep.subr.mxu0 0.0
        %850 = vmatpush1.msra.mxu0 0.0
        %851 = vmatprep.subr.mxu0 0.0
        %852 = vmatpush1.msra.mxu0 0.0
        %853 = vmatprep.subr.mxu0 0.0
        %854 = vmatpush1.msra.mxu0 0.0
        %855 = vmatprep.subr.mxu0 0.0
        %856 = vmatpush1.msra.mxu0 0.0
        %857 = vmatprep.subr.mxu0 0.0
        %858 = vmatpush1.msra.mxu0 0.0
        %859 = vmatprep.subr.mxu0 0.0
        %860 = vmatpush1.msra.mxu0 0.0
        %861 = vmatprep.subr.mxu0 0.0
        %862 = vmatpush1.msra.mxu0 0.0
        %863 = vmatprep.subr.mxu0 0.0
        %864 = vmatpush1.msra.mxu0 0.0
        %865 = vmatprep.mubr.f32.mxu0 0.0
        %866 = vmatmul.mubr.f32.gmra.mrb[0].mxu0 %v407
        %v867 = vpop.f32.mrb[0].mxu0
        %v868 = vadd.f32 0.0, %v867
        %v869 = vpop.f32.mrb[0].mxu0
        %870 = vdwg.mxu0
        %s871 = scalar_lea.vmem %s4, 288
        %v872 = vld [vmem:[%s871] sm:$0xff]
        %v873 = vld [vmem:[%s871 + $0x8] sm:$0xff]
        %v874 = vld [vmem:[%s871 + $0x10] sm:$0xff]
        %v875 = vld [vmem:[%s871 + $0x18] sm:$0xff]
        %876 = vmatprep.subr.mxu0 0.0
        %877 = vmatpush1.msra.mxu0 %v872
        %878 = vmatprep.subr.mxu0 0.0
        %879 = vmatpush1.msra.mxu0 %v873
        %880 = vmatprep.subr.mxu0 0.0
        %881 = vmatpush1.msra.mxu0 %v874
        %882 = vmatprep.subr.mxu0 0.0
        %883 = vmatpush1.msra.mxu0 %v875
        %884 = vmatprep.subr.mxu0 0.0
        %885 = vmatpush1.msra.mxu0 0.0
        %886 = vmatprep.subr.mxu0 0.0
        %887 = vmatpush1.msra.mxu0 0.0
        %888 = vmatprep.subr.mxu0 0.0
        %889 = vmatpush1.msra.mxu0 0.0
        %890 = vmatprep.subr.mxu0 0.0
        %891 = vmatpush1.msra.mxu0 0.0
        %892 = vmatprep.subr.mxu0 0.0
        %893 = vmatpush1.msra.mxu0 0.0
        %894 = vmatprep.subr.mxu0 0.0
        %895 = vmatpush1.msra.mxu0 0.0
        %896 = vmatprep.subr.mxu0 0.0
        %897 = vmatpush1.msra.mxu0 0.0
        %898 = vmatprep.subr.mxu0 0.0
        %899 = vmatpush1.msra.mxu0 0.0
        %900 = vmatprep.subr.mxu0 0.0
        %901 = vmatpush1.msra.mxu0 0.0
        %902 = vmatprep.subr.mxu0 0.0
        %903 = vmatpush1.msra.mxu0 0.0
        %904 = vmatprep.subr.mxu0 0.0
        %905 = vmatpush1.msra.mxu0 0.0
        %906 = vmatprep.subr.mxu0 0.0
        %907 = vmatpush1.msra.mxu0 0.0
        %908 = vmatprep.subr.mxu0 0.0
        %909 = vmatpush1.msra.mxu0 0.0
        %910 = vmatprep.subr.mxu0 0.0
        %911 = vmatpush1.msra.mxu0 0.0
        %912 = vmatprep.subr.mxu0 0.0
        %913 = vmatpush1.msra.mxu0 0.0
        %914 = vmatprep.subr.mxu0 0.0
        %915 = vmatpush1.msra.mxu0 0.0
        %916 = vmatprep.subr.mxu0 0.0
        %917 = vmatpush1.msra.mxu0 0.0
        %918 = vmatprep.subr.mxu0 0.0
        %919 = vmatpush1.msra.mxu0 0.0
        %920 = vmatprep.subr.mxu0 0.0
        %921 = vmatpush1.msra.mxu0 0.0
        %922 = vmatprep.subr.mxu0 0.0
        %923 = vmatpush1.msra.mxu0 0.0
        %924 = vmatprep.subr.mxu0 0.0
        %925 = vmatpush1.msra.mxu0 0.0
        %926 = vmatprep.subr.mxu0 0.0
        %927 = vmatpush1.msra.mxu0 0.0
        %928 = vmatprep.subr.mxu0 0.0
        %929 = vmatpush1.msra.mxu0 0.0
        %930 = vmatprep.subr.mxu0 0.0
        %931 = vmatpush1.msra.mxu0 0.0
        %932 = vmatprep.subr.mxu0 0.0
        %933 = vmatpush1.msra.mxu0 0.0
        %934 = vmatprep.subr.mxu0 0.0
        %935 = vmatpush1.msra.mxu0 0.0
        %936 = vmatprep.subr.mxu0 0.0
        %937 = vmatpush1.msra.mxu0 0.0
        %938 = vmatprep.subr.mxu0 0.0
        %939 = vmatpush1.msra.mxu0 0.0
        %940 = vmatprep.mubr.f32.mxu0 0.0
        %941 = vmatmul.mubr.f32.gmra.mrb[0].mxu0 %v485
        %v942 = vpop.f32.mrb[0].mxu0
        %v943 = vadd.f32 0.0, %v942
        %v944 = vpop.f32.mrb[0].mxu0
        %945 = vdwg.mxu0
        %v947 = vsel %vm557, %v793, 0
        %v950 = vsel %vm557, %v868, 0
        %952 = vmatprep.subr.mxu0 0.0
        %953 = vmatpush1.xpose.msra.mxu0 %v950
        %954 = vmatprep.subr.mxu0 0.0
        %955 = vmatpush1.xpose.msra.mxu0 0.0
        %956 = vmatprep.subr.mxu0 0.0
        %957 = vmatpush1.xpose.msra.mxu0 0.0
        %958 = vmatprep.subr.mxu0 0.0
        %959 = vmatpush1.xpose.msra.mxu0 0.0
        %960 = vmatprep.subr.mxu0 0.0
        %961 = vmatpush1.xpose.msra.mxu0 0.0
        %962 = vmatprep.subr.mxu0 0.0
        %963 = vmatpush1.xpose.msra.mxu0 0.0
        %964 = vmatprep.subr.mxu0 0.0
        %965 = vmatpush1.xpose.msra.mxu0 0.0
        %966 = vmatprep.subr.mxu0 0.0
        %967 = vmatpush1.xpose.msra.mxu0 0.0
        %968 = vmatprep.subr.mxu0 0.0
        %969 = vmatpush1.xpose.msra.mxu0 0.0
        %970 = vmatprep.subr.mxu0 0.0
        %971 = vmatpush1.xpose.msra.mxu0 0.0
        %972 = vmatprep.subr.mxu0 0.0
        %973 = vmatpush1.xpose.msra.mxu0 0.0
        %974 = vmatprep.subr.mxu0 0.0
        %975 = vmatpush1.xpose.msra.mxu0 0.0
        %976 = vmatprep.subr.mxu0 0.0
        %977 = vmatpush1.xpose.msra.mxu0 0.0
        %978 = vmatprep.subr.mxu0 0.0
        %979 = vmatpush1.xpose.msra.mxu0 0.0
        %980 = vmatprep.subr.mxu0 0.0
        %981 = vmatpush1.xpose.msra.mxu0 0.0
        %982 = vmatprep.subr.mxu0 0.0
        %983 = vmatpush1.xpose.msra.mxu0 0.0
        %984 = vmatprep.subr.mxu0 0.0
        %985 = vmatpush1.xpose.msra.mxu0 0.0
        %986 = vmatprep.subr.mxu0 0.0
        %987 = vmatpush1.xpose.msra.mxu0 0.0
        %988 = vmatprep.subr.mxu0 0.0
        %989 = vmatpush1.xpose.msra.mxu0 0.0
        %990 = vmatprep.subr.mxu0 0.0
        %991 = vmatpush1.xpose.msra.mxu0 0.0
        %992 = vmatprep.subr.mxu0 0.0
        %993 = vmatpush1.xpose.msra.mxu0 0.0
        %994 = vmatprep.subr.mxu0 0.0
        %995 = vmatpush1.xpose.msra.mxu0 0.0
        %996 = vmatprep.subr.mxu0 0.0
        %997 = vmatpush1.xpose.msra.mxu0 0.0
        %998 = vmatprep.subr.mxu0 0.0
        %999 = vmatpush1.xpose.msra.mxu0 0.0
        %1000 = vmatprep.subr.mxu0 0.0
        %1001 = vmatpush1.xpose.msra.mxu0 0.0
        %1002 = vmatprep.subr.mxu0 0.0
        %1003 = vmatpush1.xpose.msra.mxu0 0.0
        %1004 = vmatprep.subr.mxu0 0.0
        %1005 = vmatpush1.xpose.msra.mxu0 0.0
        %1006 = vmatprep.subr.mxu0 0.0
        %1007 = vmatpush1.xpose.msra.mxu0 0.0
        %1008 = vmatprep.subr.mxu0 0.0
        %1009 = vmatpush1.xpose.msra.mxu0 0.0
        %1010 = vmatprep.subr.mxu0 0.0
        %1011 = vmatpush1.xpose.msra.mxu0 0.0
        %1012 = vmatprep.subr.mxu0 0.0
        %1013 = vmatpush1.xpose.msra.mxu0 0.0
        %1014 = vmatprep.subr.mxu0 0.0
        %1015 = vmatpush1.xpose.msra.mxu0 0.0
        %1016 = vmatprep.mubr.f32.mxu0 0.0
        %1017 = vmatmul.mubr.f32.gmra.mrb[0].mxu0 %v947
        %v1018 = vpop.f32.mrb[0].mxu0
        %v1019 = vadd.f32 0.0, %v1018
        %v1020 = vpop.f32.mrb[0].mxu0
        %1021 = vdwg.mxu0
        %v1022 = vmul.f32 %v1019, 0.35355338
        %v1023 = vsel %vm322, %v1022, -1000000.0
        %v1024 = vsel %vm557, %v1023, -inf
        %1025 = vmax.xlane.f32.xlu0 %v1024
        %v1026 = vpop.xlane.xlu0 %1025
        %v1027 = vsub.f32 %v1023, %v1026
        %v1028 = vmul.f32 %v1027, 1.442695
        %v1029 = vpow.pop %v1028
        %v1030 = vsel %vm557, %v1029, 0.0
        %1031 = vadd.xlane.f32.xlu0 %v1030
        %v1032 = vpop.xlane.xlu0 %1031
        %v1033 = vrcp.pop %v1032
        %v1034 = vmul.f32 %v1029, %v1033
        %v1036 = vsel %vm557, %v1034, 0
        %1038 = vmatprep.subr.mxu0 0.0
        %1039 = vmatpush1.msra.mxu0 %v943
        %1040 = vmatprep.subr.mxu0 0.0
        %1041 = vmatpush1.msra.mxu0 0.0
        %1042 = vmatprep.subr.mxu0 0.0
        %1043 = vmatpush1.msra.mxu0 0.0
        %1044 = vmatprep.subr.mxu0 0.0
        %1045 = vmatpush1.msra.mxu0 0.0
        %1046 = vmatprep.subr.mxu0 0.0
        %1047 = vmatpush1.msra.mxu0 0.0
        %1048 = vmatprep.subr.mxu0 0.0
        %1049 = vmatpush1.msra.mxu0 0.0
        %1050 = vmatprep.subr.mxu0 0.0
        %1051 = vmatpush1.msra.mxu0 0.0
        %1052 = vmatprep.subr.mxu0 0.0
        %1053 = vmatpush1.msra.mxu0 0.0
        %1054 = vmatprep.subr.mxu0 0.0
        %1055 = vmatpush1.msra.mxu0 0.0
        %1056 = vmatprep.subr.mxu0 0.0
        %1057 = vmatpush1.msra.mxu0 0.0
        %1058 = vmatprep.subr.mxu0 0.0
        %1059 = vmatpush1.msra.mxu0 0.0
        %1060 = vmatprep.subr.mxu0 0.0
        %1061 = vmatpush1.msra.mxu0 0.0
        %1062 = vmatprep.subr.mxu0 0.0
        %1063 = vmatpush1.msra.mxu0 0.0
        %1064 = vmatprep.subr.mxu0 0.0
        %1065 = vmatpush1.msra.mxu0 0.0
        %1066 = vmatprep.subr.mxu0 0.0
        %1067 = vmatpush1.msra.mxu0 0.0
        %1068 = vmatprep.subr.mxu0 0.0
        %1069 = vmatpush1.msra.mxu0 0.0
        %1070 = vmatprep.subr.mxu0 0.0
        %1071 = vmatpush1.msra.mxu0 0.0
        %1072 = vmatprep.subr.mxu0 0.0
        %1073 = vmatpush1.msra.mxu0 0.0
        %1074 = vmatprep.subr.mxu0 0.0
        %1075 = vmatpush1.msra.mxu0 0.0
        %1076 = vmatprep.subr.mxu0 0.0
        %1077 = vmatpush1.msra.mxu0 0.0
        %1078 = vmatprep.subr.mxu0 0.0
        %1079 = vmatpush1.msra.mxu0 0.0
        %1080 = vmatprep.subr.mxu0 0.0
        %1081 = vmatpush1.msra.mxu0 0.0
        %1082 = vmatprep.subr.mxu0 0.0
        %1083 = vmatpush1.msra.mxu0 0.0
        %1084 = vmatprep.subr.mxu0 0.0
        %1085 = vmatpush1.msra.mxu0 0.0
        %1086 = vmatprep.subr.mxu0 0.0
        %1087 = vmatpush1.msra.mxu0 0.0
        %1088 = vmatprep.subr.mxu0 0.0
        %1089 = vmatpush1.msra.mxu0 0.0
        %1090 = vmatprep.subr.mxu0 0.0
        %1091 = vmatpush1.msra.mxu0 0.0
        %1092 = vmatprep.subr.mxu0 0.0
        %1093 = vmatpush1.msra.mxu0 0.0
        %1094 = vmatprep.subr.mxu0 0.0
        %1095 = vmatpush1.msra.mxu0 0.0
        %1096 = vmatprep.subr.mxu0 0.0
        %1097 = vmatpush1.msra.mxu0 0.0
        %1098 = vmatprep.subr.mxu0 0.0
        %1099 = vmatpush1.msra.mxu0 0.0
        %1100 = vmatprep.subr.mxu0 0.0
        %1101 = vmatpush1.msra.mxu0 0.0
        %1102 = vmatprep.mubr.f32.mxu0 0.0
        %1103 = vmatmul.mubr.f32.gmra.mrb[0].mxu0 %v1036
        %v1104 = vpop.f32.mrb[0].mxu0
        %v1105 = vadd.f32 0.0, %v1104
        %v1106 = vpop.f32.mrb[0].mxu0
        %1107 = vdwg.mxu0
        %1109 = vrot.lane.b32.xlu0 %v1105, 8
        %v1110 = vpop.permute.xlu0 %1109
        %vm1112 = vcmask 130112
        %1113 = vst.msk [vmem:[#allocation2] sm:$0xff] %vm1112, %v1110
        %s1114 = scalar_lea.vmem %s4, 64
        %v1115 = vld [vmem:[%s1114] sm:$0xff]
        %v1116 = vld [vmem:[%s1114 + $0x8] sm:$0xff]
        %v1117 = vld [vmem:[%s1114 + $0x10] sm:$0xff]
        %v1118 = vld [vmem:[%s1114 + $0x18] sm:$0xff]
        %1119 = vmatprep.subr.mxu0 0.0
        %1120 = vmatpush1.msra.mxu0 %v1115
        %1121 = vmatprep.subr.mxu0 0.0
        %1122 = vmatpush1.msra.mxu0 %v1116
        %1123 = vmatprep.subr.mxu0 0.0
        %1124 = vmatpush1.msra.mxu0 %v1117
        %1125 = vmatprep.subr.mxu0 0.0
        %1126 = vmatpush1.msra.mxu0 %v1118
        %1127 = vmatprep.subr.mxu0 0.0
        %1128 = vmatpush1.msra.mxu0 0.0
        %1129 = vmatprep.subr.mxu0 0.0
        %1130 = vmatpush1.msra.mxu0 0.0
        %1131 = vmatprep.subr.mxu0 0.0
        %1132 = vmatpush1.msra.mxu0 0.0
        %1133 = vmatprep.subr.mxu0 0.0
        %1134 = vmatpush1.msra.mxu0 0.0
        %1135 = vmatprep.subr.mxu0 0.0
        %1136 = vmatpush1.msra.mxu0 0.0
        %1137 = vmatprep.subr.mxu0 0.0
        %1138 = vmatpush1.msra.mxu0 0.0
        %1139 = vmatprep.subr.mxu0 0.0
        %1140 = vmatpush1.msra.mxu0 0.0
        %1141 = vmatprep.subr.mxu0 0.0
        %1142 = vmatpush1.msra.mxu0 0.0
        %1143 = vmatprep.subr.mxu0 0.0
        %1144 = vmatpush1.msra.mxu0 0.0
        %1145 = vmatprep.subr.mxu0 0.0
        %1146 = vmatpush1.msra.mxu0 0.0
        %1147 = vmatprep.subr.mxu0 0.0
        %1148 = vmatpush1.msra.mxu0 0.0
        %1149 = vmatprep.subr.mxu0 0.0
        %1150 = vmatpush1.msra.mxu0 0.0
        %1151 = vmatprep.subr.mxu0 0.0
        %1152 = vmatpush1.msra.mxu0 0.0
        %1153 = vmatprep.subr.mxu0 0.0
        %1154 = vmatpush1.msra.mxu0 0.0
        %1155 = vmatprep.subr.mxu0 0.0
        %1156 = vmatpush1.msra.mxu0 0.0
        %1157 = vmatprep.subr.mxu0 0.0
        %1158 = vmatpush1.msra.mxu0 0.0
        %1159 = vmatprep.subr.mxu0 0.0
        %1160 = vmatpush1.msra.mxu0 0.0
        %1161 = vmatprep.subr.mxu0 0.0
        %1162 = vmatpush1.msra.mxu0 0.0
        %1163 = vmatprep.subr.mxu0 0.0
        %1164 = vmatpush1.msra.mxu0 0.0
        %1165 = vmatprep.subr.mxu0 0.0
        %1166 = vmatpush1.msra.mxu0 0.0
        %1167 = vmatprep.subr.mxu0 0.0
        %1168 = vmatpush1.msra.mxu0 0.0
        %1169 = vmatprep.subr.mxu0 0.0
        %1170 = vmatpush1.msra.mxu0 0.0
        %1171 = vmatprep.subr.mxu0 0.0
        %1172 = vmatpush1.msra.mxu0 0.0
        %1173 = vmatprep.subr.mxu0 0.0
        %1174 = vmatpush1.msra.mxu0 0.0
        %1175 = vmatprep.subr.mxu0 0.0
        %1176 = vmatpush1.msra.mxu0 0.0
        %1177 = vmatprep.subr.mxu0 0.0
        %1178 = vmatpush1.msra.mxu0 0.0
        %1179 = vmatprep.subr.mxu0 0.0
        %1180 = vmatpush1.msra.mxu0 0.0
        %1181 = vmatprep.subr.mxu0 0.0
        %1182 = vmatpush1.msra.mxu0 0.0
        %1183 = vmatprep.mubr.f32.mxu0 0.0
        %1184 = vmatmul.mubr.f32.gmra.mrb[0].mxu0 %v329
        %v1185 = vpop.f32.mrb[0].mxu0
        %v1186 = vadd.f32 0.0, %v1185
        %v1187 = vpop.f32.mrb[0].mxu0
        %1188 = vdwg.mxu0
        %s1189 = scalar_lea.vmem %s4, 192
        %v1190 = vld [vmem:[%s1189] sm:$0xff]
        %v1191 = vld [vmem:[%s1189 + $0x8] sm:$0xff]
        %v1192 = vld [vmem:[%s1189 + $0x10] sm:$0xff]
        %v1193 = vld [vmem:[%s1189 + $0x18] sm:$0xff]
        %1194 = vmatprep.subr.mxu0 0.0
        %1195 = vmatpush1.msra.mxu0 %v1190
        %1196 = vmatprep.subr.mxu0 0.0
        %1197 = vmatpush1.msra.mxu0 %v1191
        %1198 = vmatprep.subr.mxu0 0.0
        %1199 = vmatpush1.msra.mxu0 %v1192
        %1200 = vmatprep.subr.mxu0 0.0
        %1201 = vmatpush1.msra.mxu0 %v1193
        %1202 = vmatprep.subr.mxu0 0.0
        %1203 = vmatpush1.msra.mxu0 0.0
        %1204 = vmatprep.subr.mxu0 0.0
        %1205 = vmatpush1.msra.mxu0 0.0
        %1206 = vmatprep.subr.mxu0 0.0
        %1207 = vmatpush1.msra.mxu0 0.0
        %1208 = vmatprep.subr.mxu0 0.0
        %1209 = vmatpush1.msra.mxu0 0.0
        %1210 = vmatprep.subr.mxu0 0.0
        %1211 = vmatpush1.msra.mxu0 0.0
        %1212 = vmatprep.subr.mxu0 0.0
        %1213 = vmatpush1.msra.mxu0 0.0
        %1214 = vmatprep.subr.mxu0 0.0
        %1215 = vmatpush1.msra.mxu0 0.0
        %1216 = vmatprep.subr.mxu0 0.0
        %1217 = vmatpush1.msra.mxu0 0.0
        %1218 = vmatprep.subr.mxu0 0.0
        %1219 = vmatpush1.msra.mxu0 0.0
        %1220 = vmatprep.subr.mxu0 0.0
        %1221 = vmatpush1.msra.mxu0 0.0
        %1222 = vmatprep.subr.mxu0 0.0
        %1223 = vmatpush1.msra.mxu0 0.0
        %1224 = vmatprep.subr.mxu0 0.0
        %1225 = vmatpush1.msra.mxu0 0.0
        %1226 = vmatprep.subr.mxu0 0.0
        %1227 = vmatpush1.msra.mxu0 0.0
        %1228 = vmatprep.subr.mxu0 0.0
        %1229 = vmatpush1.msra.mxu0 0.0
        %1230 = vmatprep.subr.mxu0 0.0
        %1231 = vmatpush1.msra.mxu0 0.0
        %1232 = vmatprep.subr.mxu0 0.0
        %1233 = vmatpush1.msra.mxu0 0.0
        %1234 = vmatprep.subr.mxu0 0.0
        %1235 = vmatpush1.msra.mxu0 0.0
        %1236 = vmatprep.subr.mxu0 0.0
        %1237 = vmatpush1.msra.mxu0 0.0
        %1238 = vmatprep.subr.mxu0 0.0
        %1239 = vmatpush1.msra.mxu0 0.0
        %1240 = vmatprep.subr.mxu0 0.0
        %1241 = vmatpush1.msra.mxu0 0.0
        %1242 = vmatprep.subr.mxu0 0.0
        %1243 = vmatpush1.msra.mxu0 0.0
        %1244 = vmatprep.subr.mxu0 0.0
        %1245 = vmatpush1.msra.mxu0 0.0
        %1246 = vmatprep.subr.mxu0 0.0
        %1247 = vmatpush1.msra.mxu0 0.0
        %1248 = vmatprep.subr.mxu0 0.0
        %1249 = vmatpush1.msra.mxu0 0.0
        %1250 = vmatprep.subr.mxu0 0.0
        %1251 = vmatpush1.msra.mxu0 0.0
        %1252 = vmatprep.subr.mxu0 0.0
        %1253 = vmatpush1.msra.mxu0 0.0
        %1254 = vmatprep.subr.mxu0 0.0
        %1255 = vmatpush1.msra.mxu0 0.0
        %1256 = vmatprep.subr.mxu0 0.0
        %1257 = vmatpush1.msra.mxu0 0.0
        %1258 = vmatprep.mubr.f32.mxu0 0.0
        %1259 = vmatmul.mubr.f32.gmra.mrb[0].mxu0 %v407
        %v1260 = vpop.f32.mrb[0].mxu0
        %v1261 = vadd.f32 0.0, %v1260
        %v1262 = vpop.f32.mrb[0].mxu0
        %1263 = vdwg.mxu0
        %s1264 = scalar_lea.vmem %s4, 320
        %v1265 = vld [vmem:[%s1264] sm:$0xff]
        %v1266 = vld [vmem:[%s1264 + $0x8] sm:$0xff]
        %v1267 = vld [vmem:[%s1264 + $0x10] sm:$0xff]
        %v1268 = vld [vmem:[%s1264 + $0x18] sm:$0xff]
        %1269 = vmatprep.subr.mxu0 0.0
        %1270 = vmatpush1.msra.mxu0 %v1265
        %1271 = vmatprep.subr.mxu0 0.0
        %1272 = vmatpush1.msra.mxu0 %v1266
        %1273 = vmatprep.subr.mxu0 0.0
        %1274 = vmatpush1.msra.mxu0 %v1267
        %1275 = vmatprep.subr.mxu0 0.0
        %1276 = vmatpush1.msra.mxu0 %v1268
        %1277 = vmatprep.subr.mxu0 0.0
        %1278 = vmatpush1.msra.mxu0 0.0
        %1279 = vmatprep.subr.mxu0 0.0
        %1280 = vmatpush1.msra.mxu0 0.0
        %1281 = vmatprep.subr.mxu0 0.0
        %1282 = vmatpush1.msra.mxu0 0.0
        %1283 = vmatprep.subr.mxu0 0.0
        %1284 = vmatpush1.msra.mxu0 0.0
        %1285 = vmatprep.subr.mxu0 0.0
        %1286 = vmatpush1.msra.mxu0 0.0
        %1287 = vmatprep.subr.mxu0 0.0
        %1288 = vmatpush1.msra.mxu0 0.0
        %1289 = vmatprep.subr.mxu0 0.0
        %1290 = vmatpush1.msra.mxu0 0.0
        %1291 = vmatprep.subr.mxu0 0.0
        %1292 = vmatpush1.msra.mxu0 0.0
        %1293 = vmatprep.subr.mxu0 0.0
        %1294 = vmatpush1.msra.mxu0 0.0
        %1295 = vmatprep.subr.mxu0 0.0
        %1296 = vmatpush1.msra.mxu0 0.0
        %1297 = vmatprep.subr.mxu0 0.0
        %1298 = vmatpush1.msra.mxu0 0.0
        %1299 = vmatprep.subr.mxu0 0.0
        %1300 = vmatpush1.msra.mxu0 0.0
        %1301 = vmatprep.subr.mxu0 0.0
        %1302 = vmatpush1.msra.mxu0 0.0
        %1303 = vmatprep.subr.mxu0 0.0
        %1304 = vmatpush1.msra.mxu0 0.0
        %1305 = vmatprep.subr.mxu0 0.0
        %1306 = vmatpush1.msra.mxu0 0.0
        %1307 = vmatprep.subr.mxu0 0.0
        %1308 = vmatpush1.msra.mxu0 0.0
        %1309 = vmatprep.subr.mxu0 0.0
        %1310 = vmatpush1.msra.mxu0 0.0
        %1311 = vmatprep.subr.mxu0 0.0
        %1312 = vmatpush1.msra.mxu0 0.0
        %1313 = vmatprep.subr.mxu0 0.0
        %1314 = vmatpush1.msra.mxu0 0.0
        %1315 = vmatprep.subr.mxu0 0.0
        %1316 = vmatpush1.msra.mxu0 0.0
        %1317 = vmatprep.subr.mxu0 0.0
        %1318 = vmatpush1.msra.mxu0 0.0
        %1319 = vmatprep.subr.mxu0 0.0
        %1320 = vmatpush1.msra.mxu0 0.0
        %1321 = vmatprep.subr.mxu0 0.0
        %1322 = vmatpush1.msra.mxu0 0.0
        %1323 = vmatprep.subr.mxu0 0.0
        %1324 = vmatpush1.msra.mxu0 0.0
        %1325 = vmatprep.subr.mxu0 0.0
        %1326 = vmatpush1.msra.mxu0 0.0
        %1327 = vmatprep.subr.mxu0 0.0
        %1328 = vmatpush1.msra.mxu0 0.0
        %1329 = vmatprep.subr.mxu0 0.0
        %1330 = vmatpush1.msra.mxu0 0.0
        %1331 = vmatprep.subr.mxu0 0.0
        %1332 = vmatpush1.msra.mxu0 0.0
        %1333 = vmatprep.mubr.f32.mxu0 0.0
        %1334 = vmatmul.mubr.f32.gmra.mrb[0].mxu0 %v485
        %v1335 = vpop.f32.mrb[0].mxu0
        %v1336 = vadd.f32 0.0, %v1335
        %v1337 = vpop.f32.mrb[0].mxu0
        %1338 = vdwg.mxu0
        %v1340 = vsel %vm557, %v1186, 0
        %v1343 = vsel %vm557, %v1261, 0
        %1345 = vmatprep.subr.mxu0 0.0
        %1346 = vmatpush1.xpose.msra.mxu0 %v1343
        %1347 = vmatprep.subr.mxu0 0.0
        %1348 = vmatpush1.xpose.msra.mxu0 0.0
        %1349 = vmatprep.subr.mxu0 0.0
        %1350 = vmatpush1.xpose.msra.mxu0 0.0
        %1351 = vmatprep.subr.mxu0 0.0
        %1352 = vmatpush1.xpose.msra.mxu0 0.0
        %1353 = vmatprep.subr.mxu0 0.0
        %1354 = vmatpush1.xpose.msra.mxu0 0.0
        %1355 = vmatprep.subr.mxu0 0.0
        %1356 = vmatpush1.xpose.msra.mxu0 0.0
        %1357 = vmatprep.subr.mxu0 0.0
        %1358 = vmatpush1.xpose.msra.mxu0 0.0
        %1359 = vmatprep.subr.mxu0 0.0
        %1360 = vmatpush1.xpose.msra.mxu0 0.0
        %1361 = vmatprep.subr.mxu0 0.0
        %1362 = vmatpush1.xpose.msra.mxu0 0.0
        %1363 = vmatprep.subr.mxu0 0.0
        %1364 = vmatpush1.xpose.msra.mxu0 0.0
        %1365 = vmatprep.subr.mxu0 0.0
        %1366 = vmatpush1.xpose.msra.mxu0 0.0
        %1367 = vmatprep.subr.mxu0 0.0
        %1368 = vmatpush1.xpose.msra.mxu0 0.0
        %1369 = vmatprep.subr.mxu0 0.0
        %1370 = vmatpush1.xpose.msra.mxu0 0.0
        %1371 = vmatprep.subr.mxu0 0.0
        %1372 = vmatpush1.xpose.msra.mxu0 0.0
        %1373 = vmatprep.subr.mxu0 0.0
        %1374 = vmatpush1.xpose.msra.mxu0 0.0
        %1375 = vmatprep.subr.mxu0 0.0
        %1376 = vmatpush1.xpose.msra.mxu0 0.0
        %1377 = vmatprep.subr.mxu0 0.0
        %1378 = vmatpush1.xpose.msra.mxu0 0.0
        %1379 = vmatprep.subr.mxu0 0.0
        %1380 = vmatpush1.xpose.msra.mxu0 0.0
        %1381 = vmatprep.subr.mxu0 0.0
        %1382 = vmatpush1.xpose.msra.mxu0 0.0
        %1383 = vmatprep.subr.mxu0 0.0
        %1384 = vmatpush1.xpose.msra.mxu0 0.0
        %1385 = vmatprep.subr.mxu0 0.0
        %1386 = vmatpush1.xpose.msra.mxu0 0.0
        %1387 = vmatprep.subr.mxu0 0.0
        %1388 = vmatpush1.xpose.msra.mxu0 0.0
        %1389 = vmatprep.subr.mxu0 0.0
        %1390 = vmatpush1.xpose.msra.mxu0 0.0
        %1391 = vmatprep.subr.mxu0 0.0
        %1392 = vmatpush1.xpose.msra.mxu0 0.0
        %1393 = vmatprep.subr.mxu0 0.0
        %1394 = vmatpush1.xpose.msra.mxu0 0.0
        %1395 = vmatprep.subr.mxu0 0.0
        %1396 = vmatpush1.xpose.msra.mxu0 0.0
        %1397 = vmatprep.subr.mxu0 0.0
        %1398 = vmatpush1.xpose.msra.mxu0 0.0
        %1399 = vmatprep.subr.mxu0 0.0
        %1400 = vmatpush1.xpose.msra.mxu0 0.0
        %1401 = vmatprep.subr.mxu0 0.0
        %1402 = vmatpush1.xpose.msra.mxu0 0.0
        %1403 = vmatprep.subr.mxu0 0.0
        %1404 = vmatpush1.xpose.msra.mxu0 0.0
        %1405 = vmatprep.subr.mxu0 0.0
        %1406 = vmatpush1.xpose.msra.mxu0 0.0
        %1407 = vmatprep.subr.mxu0 0.0
        %1408 = vmatpush1.xpose.msra.mxu0 0.0
        %1409 = vmatprep.mubr.f32.mxu0 0.0
        %1410 = vmatmul.mubr.f32.gmra.mrb[0].mxu0 %v1340
        %v1411 = vpop.f32.mrb[0].mxu0
        %v1412 = vadd.f32 0.0, %v1411
        %v1413 = vpop.f32.mrb[0].mxu0
        %1414 = vdwg.mxu0
        %v1415 = vmul.f32 %v1412, 0.35355338
        %v1416 = vsel %vm322, %v1415, -1000000.0
        %v1417 = vsel %vm557, %v1416, -inf
        %1418 = vmax.xlane.f32.xlu0 %v1417
        %v1419 = vpop.xlane.xlu0 %1418
        %v1420 = vsub.f32 %v1416, %v1419
        %v1421 = vmul.f32 %v1420, 1.442695
        %v1422 = vpow.pop %v1421
        %v1423 = vsel %vm557, %v1422, 0.0
        %1424 = vadd.xlane.f32.xlu0 %v1423
        %v1425 = vpop.xlane.xlu0 %1424
        %v1426 = vrcp.pop %v1425
        %v1427 = vmul.f32 %v1422, %v1426
        %v1429 = vsel %vm557, %v1427, 0
        %1431 = vmatprep.subr.mxu0 0.0
        %1432 = vmatpush1.msra.mxu0 %v1336
        %1433 = vmatprep.subr.mxu0 0.0
        %1434 = vmatpush1.msra.mxu0 0.0
        %1435 = vmatprep.subr.mxu0 0.0
        %1436 = vmatpush1.msra.mxu0 0.0
        %1437 = vmatprep.subr.mxu0 0.0
        %1438 = vmatpush1.msra.mxu0 0.0
        %1439 = vmatprep.subr.mxu0 0.0
        %1440 = vmatpush1.msra.mxu0 0.0
        %1441 = vmatprep.subr.mxu0 0.0
        %1442 = vmatpush1.msra.mxu0 0.0
        %1443 = vmatprep.subr.mxu0 0.0
        %1444 = vmatpush1.msra.mxu0 0.0
        %1445 = vmatprep.subr.mxu0 0.0
        %1446 = vmatpush1.msra.mxu0 0.0
        %1447 = vmatprep.subr.mxu0 0.0
        %1448 = vmatpush1.msra.mxu0 0.0
        %1449 = vmatprep.subr.mxu0 0.0
        %1450 = vmatpush1.msra.mxu0 0.0
        %1451 = vmatprep.subr.mxu0 0.0
        %1452 = vmatpush1.msra.mxu0 0.0
        %1453 = vmatprep.subr.mxu0 0.0
        %1454 = vmatpush1.msra.mxu0 0.0
        %1455 = vmatprep.subr.mxu0 0.0
        %1456 = vmatpush1.msra.mxu0 0.0
        %1457 = vmatprep.subr.mxu0 0.0
        %1458 = vmatpush1.msra.mxu0 0.0
        %1459 = vmatprep.subr.mxu0 0.0
        %1460 = vmatpush1.msra.mxu0 0.0
        %1461 = vmatprep.subr.mxu0 0.0
        %1462 = vmatpush1.msra.mxu0 0.0
        %1463 = vmatprep.subr.mxu0 0.0
        %1464 = vmatpush1.msra.mxu0 0.0
        %1465 = vmatprep.subr.mxu0 0.0
        %1466 = vmatpush1.msra.mxu0 0.0
        %1467 = vmatprep.subr.mxu0 0.0
        %1468 = vmatpush1.msra.mxu0 0.0
        %1469 = vmatprep.subr.mxu0 0.0
        %1470 = vmatpush1.msra.mxu0 0.0
        %1471 = vmatprep.subr.mxu0 0.0
        %1472 = vmatpush1.msra.mxu0 0.0
        %1473 = vmatprep.subr.mxu0 0.0
        %1474 = vmatpush1.msra.mxu0 0.0
        %1475 = vmatprep.subr.mxu0 0.0
        %1476 = vmatpush1.msra.mxu0 0.0
        %1477 = vmatprep.subr.mxu0 0.0
        %1478 = vmatpush1.msra.mxu0 0.0
        %1479 = vmatprep.subr.mxu0 0.0
        %1480 = vmatpush1.msra.mxu0 0.0
        %1481 = vmatprep.subr.mxu0 0.0
        %1482 = vmatpush1.msra.mxu0 0.0
        %1483 = vmatprep.subr.mxu0 0.0
        %1484 = vmatpush1.msra.mxu0 0.0
        %1485 = vmatprep.subr.mxu0 0.0
        %1486 = vmatpush1.msra.mxu0 0.0
        %1487 = vmatprep.subr.mxu0 0.0
        %1488 = vmatpush1.msra.mxu0 0.0
        %1489 = vmatprep.subr.mxu0 0.0
        %1490 = vmatpush1.msra.mxu0 0.0
        %1491 = vmatprep.subr.mxu0 0.0
        %1492 = vmatpush1.msra.mxu0 0.0
        %1493 = vmatprep.subr.mxu0 0.0
        %1494 = vmatpush1.msra.mxu0 0.0
        %1495 = vmatprep.mubr.f32.mxu0 0.0
        %1496 = vmatmul.mubr.f32.gmra.mrb[0].mxu0 %v1429
        %v1497 = vpop.f32.mrb[0].mxu0
        %v1498 = vadd.f32 0.0, %v1497
        %v1499 = vpop.f32.mrb[0].mxu0
        %1500 = vdwg.mxu0
        %1502 = vrot.lane.b32.xlu0 %v1498, 16
        %v1503 = vpop.permute.xlu0 %1502
        %vm1505 = vcmask 195712
        %1506 = vst.msk [vmem:[#allocation2] sm:$0xff] %vm1505, %v1503
        %s1507 = scalar_lea.vmem %s4, 96
        %v1508 = vld [vmem:[%s1507] sm:$0xff]
        %v1509 = vld [vmem:[%s1507 + $0x8] sm:$0xff]
        %v1510 = vld [vmem:[%s1507 + $0x10] sm:$0xff]
        %v1511 = vld [vmem:[%s1507 + $0x18] sm:$0xff]
        %1512 = vmatprep.subr.mxu0 0.0
        %1513 = vmatpush1.msra.mxu0 %v1508
        %1514 = vmatprep.subr.mxu0 0.0
        %1515 = vmatpush1.msra.mxu0 %v1509
        %1516 = vmatprep.subr.mxu0 0.0
        %1517 = vmatpush1.msra.mxu0 %v1510
        %1518 = vmatprep.subr.mxu0 0.0
        %1519 = vmatpush1.msra.mxu0 %v1511
        %1520 = vmatprep.subr.mxu0 0.0
        %1521 = vmatpush1.msra.mxu0 0.0
        %1522 = vmatprep.subr.mxu0 0.0
        %1523 = vmatpush1.msra.mxu0 0.0
        %1524 = vmatprep.subr.mxu0 0.0
        %1525 = vmatpush1.msra.mxu0 0.0
        %1526 = vmatprep.subr.mxu0 0.0
        %1527 = vmatpush1.msra.mxu0 0.0
        %1528 = vmatprep.subr.mxu0 0.0
        %1529 = vmatpush1.msra.mxu0 0.0
        %1530 = vmatprep.subr.mxu0 0.0
        %1531 = vmatpush1.msra.mxu0 0.0
        %1532 = vmatprep.subr.mxu0 0.0
        %1533 = vmatpush1.msra.mxu0 0.0
        %1534 = vmatprep.subr.mxu0 0.0
        %1535 = vmatpush1.msra.mxu0 0.0
        %1536 = vmatprep.subr.mxu0 0.0
        %1537 = vmatpush1.msra.mxu0 0.0
        %1538 = vmatprep.subr.mxu0 0.0
        %1539 = vmatpush1.msra.mxu0 0.0
        %1540 = vmatprep.subr.mxu0 0.0
        %1541 = vmatpush1.msra.mxu0 0.0
        %1542 = vmatprep.subr.mxu0 0.0
        %1543 = vmatpush1.msra.mxu0 0.0
        %1544 = vmatprep.subr.mxu0 0.0
        %1545 = vmatpush1.msra.mxu0 0.0
        %1546 = vmatprep.subr.mxu0 0.0
        %1547 = vmatpush1.msra.mxu0 0.0
        %1548 = vmatprep.subr.mxu0 0.0
        %1549 = vmatpush1.msra.mxu0 0.0
        %1550 = vmatprep.subr.mxu0 0.0
        %1551 = vmatpush1.msra.mxu0 0.0
        %1552 = vmatprep.subr.mxu0 0.0
        %1553 = vmatpush1.msra.mxu0 0.0
        %1554 = vmatprep.subr.mxu0 0.0
        %1555 = vmatpush1.msra.mxu0 0.0
        %1556 = vmatprep.subr.mxu0 0.0
        %1557 = vmatpush1.msra.mxu0 0.0
        %1558 = vmatprep.subr.mxu0 0.0
        %1559 = vmatpush1.msra.mxu0 0.0
        %1560 = vmatprep.subr.mxu0 0.0
        %1561 = vmatpush1.msra.mxu0 0.0
        %1562 = vmatprep.subr.mxu0 0.0
        %1563 = vmatpush1.msra.mxu0 0.0
        %1564 = vmatprep.subr.mxu0 0.0
        %1565 = vmatpush1.msra.mxu0 0.0
        %1566 = vmatprep.subr.mxu0 0.0
        %1567 = vmatpush1.msra.mxu0 0.0
        %1568 = vmatprep.subr.mxu0 0.0
        %1569 = vmatpush1.msra.mxu0 0.0
        %1570 = vmatprep.subr.mxu0 0.0
        %1571 = vmatpush1.msra.mxu0 0.0
        %1572 = vmatprep.subr.mxu0 0.0
        %1573 = vmatpush1.msra.mxu0 0.0
        %1574 = vmatprep.subr.mxu0 0.0
        %1575 = vmatpush1.msra.mxu0 0.0
        %1576 = vmatprep.mubr.f32.mxu0 0.0
        %1577 = vmatmul.mubr.f32.gmra.mrb[0].mxu0 %v329
        %v1578 = vpop.f32.mrb[0].mxu0
        %v1579 = vadd.f32 0.0, %v1578
        %v1580 = vpop.f32.mrb[0].mxu0
        %1581 = vdwg.mxu0
        %s1582 = scalar_lea.vmem %s4, 224
        %v1583 = vld [vmem:[%s1582] sm:$0xff]
        %v1584 = vld [vmem:[%s1582 + $0x8] sm:$0xff]
        %v1585 = vld [vmem:[%s1582 + $0x10] sm:$0xff]
        %v1586 = vld [vmem:[%s1582 + $0x18] sm:$0xff]
        %1587 = vmatprep.subr.mxu0 0.0
        %1588 = vmatpush1.msra.mxu0 %v1583
        %1589 = vmatprep.subr.mxu0 0.0
        %1590 = vmatpush1.msra.mxu0 %v1584
        %1591 = vmatprep.subr.mxu0 0.0
        %1592 = vmatpush1.msra.mxu0 %v1585
        %1593 = vmatprep.subr.mxu0 0.0
        %1594 = vmatpush1.msra.mxu0 %v1586
        %1595 = vmatprep.subr.mxu0 0.0
        %1596 = vmatpush1.msra.mxu0 0.0
        %1597 = vmatprep.subr.mxu0 0.0
        %1598 = vmatpush1.msra.mxu0 0.0
        %1599 = vmatprep.subr.mxu0 0.0
        %1600 = vmatpush1.msra.mxu0 0.0
        %1601 = vmatprep.subr.mxu0 0.0
        %1602 = vmatpush1.msra.mxu0 0.0
        %1603 = vmatprep.subr.mxu0 0.0
        %1604 = vmatpush1.msra.mxu0 0.0
        %1605 = vmatprep.subr.mxu0 0.0
        %1606 = vmatpush1.msra.mxu0 0.0
        %1607 = vmatprep.subr.mxu0 0.0
        %1608 = vmatpush1.msra.mxu0 0.0
        %1609 = vmatprep.subr.mxu0 0.0
        %1610 = vmatpush1.msra.mxu0 0.0
        %1611 = vmatprep.subr.mxu0 0.0
        %1612 = vmatpush1.msra.mxu0 0.0
        %1613 = vmatprep.subr.mxu0 0.0
        %1614 = vmatpush1.msra.mxu0 0.0
        %1615 = vmatprep.subr.mxu0 0.0
        %1616 = vmatpush1.msra.mxu0 0.0
        %1617 = vmatprep.subr.mxu0 0.0
        %1618 = vmatpush1.msra.mxu0 0.0
        %1619 = vmatprep.subr.mxu0 0.0
        %1620 = vmatpush1.msra.mxu0 0.0
        %1621 = vmatprep.subr.mxu0 0.0
        %1622 = vmatpush1.msra.mxu0 0.0
        %1623 = vmatprep.subr.mxu0 0.0
        %1624 = vmatpush1.msra.mxu0 0.0
        %1625 = vmatprep.subr.mxu0 0.0
        %1626 = vmatpush1.msra.mxu0 0.0
        %1627 = vmatprep.subr.mxu0 0.0
        %1628 = vmatpush1.msra.mxu0 0.0
        %1629 = vmatprep.subr.mxu0 0.0
        %1630 = vmatpush1.msra.mxu0 0.0
        %1631 = vmatprep.subr.mxu0 0.0
        %1632 = vmatpush1.msra.mxu0 0.0
        %1633 = vmatprep.subr.mxu0 0.0
        %1634 = vmatpush1.msra.mxu0 0.0
        %1635 = vmatprep.subr.mxu0 0.0
        %1636 = vmatpush1.msra.mxu0 0.0
        %1637 = vmatprep.subr.mxu0 0.0
        %1638 = vmatpush1.msra.mxu0 0.0
        %1639 = vmatprep.subr.mxu0 0.0
        %1640 = vmatpush1.msra.mxu0 0.0
        %1641 = vmatprep.subr.mxu0 0.0
        %1642 = vmatpush1.msra.mxu0 0.0
        %1643 = vmatprep.subr.mxu0 0.0
        %1644 = vmatpush1.msra.mxu0 0.0
        %1645 = vmatprep.subr.mxu0 0.0
        %1646 = vmatpush1.msra.mxu0 0.0
        %1647 = vmatprep.subr.mxu0 0.0
        %1648 = vmatpush1.msra.mxu0 0.0
        %1649 = vmatprep.subr.mxu0 0.0
        %1650 = vmatpush1.msra.mxu0 0.0
        %1651 = vmatprep.mubr.f32.mxu0 0.0
        %1652 = vmatmul.mubr.f32.gmra.mrb[0].mxu0 %v407
        %v1653 = vpop.f32.mrb[0].mxu0
        %v1654 = vadd.f32 0.0, %v1653
        %v1655 = vpop.f32.mrb[0].mxu0
        %1656 = vdwg.mxu0
        %s1657 = scalar_lea.vmem %s4, 352
        %v1658 = vld [vmem:[%s1657] sm:$0xff]
        %v1659 = vld [vmem:[%s1657 + $0x8] sm:$0xff]
        %v1660 = vld [vmem:[%s1657 + $0x10] sm:$0xff]
        %v1661 = vld [vmem:[%s1657 + $0x18] sm:$0xff]
        %1662 = vmatprep.subr.mxu0 0.0
        %1663 = vmatpush1.msra.mxu0 %v1658
        %1664 = vmatprep.subr.mxu0 0.0
        %1665 = vmatpush1.msra.mxu0 %v1659
        %1666 = vmatprep.subr.mxu0 0.0
        %1667 = vmatpush1.msra.mxu0 %v1660
        %1668 = vmatprep.subr.mxu0 0.0
        %1669 = vmatpush1.msra.mxu0 %v1661
        %1670 = vmatprep.subr.mxu0 0.0
        %1671 = vmatpush1.msra.mxu0 0.0
        %1672 = vmatprep.subr.mxu0 0.0
        %1673 = vmatpush1.msra.mxu0 0.0
        %1674 = vmatprep.subr.mxu0 0.0
        %1675 = vmatpush1.msra.mxu0 0.0
        %1676 = vmatprep.subr.mxu0 0.0
        %1677 = vmatpush1.msra.mxu0 0.0
        %1678 = vmatprep.subr.mxu0 0.0
        %1679 = vmatpush1.msra.mxu0 0.0
        %1680 = vmatprep.subr.mxu0 0.0
        %1681 = vmatpush1.msra.mxu0 0.0
        %1682 = vmatprep.subr.mxu0 0.0
        %1683 = vmatpush1.msra.mxu0 0.0
        %1684 = vmatprep.subr.mxu0 0.0
        %1685 = vmatpush1.msra.mxu0 0.0
        %1686 = vmatprep.subr.mxu0 0.0
        %1687 = vmatpush1.msra.mxu0 0.0
        %1688 = vmatprep.subr.mxu0 0.0
        %1689 = vmatpush1.msra.mxu0 0.0
        %1690 = vmatprep.subr.mxu0 0.0
        %1691 = vmatpush1.msra.mxu0 0.0
        %1692 = vmatprep.subr.mxu0 0.0
        %1693 = vmatpush1.msra.mxu0 0.0
        %1694 = vmatprep.subr.mxu0 0.0
        %1695 = vmatpush1.msra.mxu0 0.0
        %1696 = vmatprep.subr.mxu0 0.0
        %1697 = vmatpush1.msra.mxu0 0.0
        %1698 = vmatprep.subr.mxu0 0.0
        %1699 = vmatpush1.msra.mxu0 0.0
        %1700 = vmatprep.subr.mxu0 0.0
        %1701 = vmatpush1.msra.mxu0 0.0
        %1702 = vmatprep.subr.mxu0 0.0
        %1703 = vmatpush1.msra.mxu0 0.0
        %1704 = vmatprep.subr.mxu0 0.0
        %1705 = vmatpush1.msra.mxu0 0.0
        %1706 = vmatprep.subr.mxu0 0.0
        %1707 = vmatpush1.msra.mxu0 0.0
        %1708 = vmatprep.subr.mxu0 0.0
        %1709 = vmatpush1.msra.mxu0 0.0
        %1710 = vmatprep.subr.mxu0 0.0
        %1711 = vmatpush1.msra.mxu0 0.0
        %1712 = vmatprep.subr.mxu0 0.0
        %1713 = vmatpush1.msra.mxu0 0.0
        %1714 = vmatprep.subr.mxu0 0.0
        %1715 = vmatpush1.msra.mxu0 0.0
        %1716 = vmatprep.subr.mxu0 0.0
        %1717 = vmatpush1.msra.mxu0 0.0
        %1718 = vmatprep.subr.mxu0 0.0
        %1719 = vmatpush1.msra.mxu0 0.0
        %1720 = vmatprep.subr.mxu0 0.0
        %1721 = vmatpush1.msra.mxu0 0.0
        %1722 = vmatprep.subr.mxu0 0.0
        %1723 = vmatpush1.msra.mxu0 0.0
        %1724 = vmatprep.subr.mxu0 0.0
        %1725 = vmatpush1.msra.mxu0 0.0
        %1726 = vmatprep.mubr.f32.mxu0 0.0
        %1727 = vmatmul.mubr.f32.gmra.mrb[0].mxu0 %v485
        %v1728 = vpop.f32.mrb[0].mxu0
        %v1729 = vadd.f32 0.0, %v1728
        %v1730 = vpop.f32.mrb[0].mxu0
        %1731 = vdwg.mxu0
        %v1733 = vsel %vm557, %v1579, 0
        %v1736 = vsel %vm557, %v1654, 0
        %1738 = vmatprep.subr.mxu0 0.0
        %1739 = vmatpush1.xpose.msra.mxu0 %v1736
        %1740 = vmatprep.subr.mxu0 0.0
        %1741 = vmatpush1.xpose.msra.mxu0 0.0
        %1742 = vmatprep.subr.mxu0 0.0
        %1743 = vmatpush1.xpose.msra.mxu0 0.0
        %1744 = vmatprep.subr.mxu0 0.0
        %1745 = vmatpush1.xpose.msra.mxu0 0.0
        %1746 = vmatprep.subr.mxu0 0.0
        %1747 = vmatpush1.xpose.msra.mxu0 0.0
        %1748 = vmatprep.subr.mxu0 0.0
        %1749 = vmatpush1.xpose.msra.mxu0 0.0
        %1750 = vmatprep.subr.mxu0 0.0
        %1751 = vmatpush1.xpose.msra.mxu0 0.0
        %1752 = vmatprep.subr.mxu0 0.0
        %1753 = vmatpush1.xpose.msra.mxu0 0.0
        %1754 = vmatprep.subr.mxu0 0.0
        %1755 = vmatpush1.xpose.msra.mxu0 0.0
        %1756 = vmatprep.subr.mxu0 0.0
        %1757 = vmatpush1.xpose.msra.mxu0 0.0
        %1758 = vmatprep.subr.mxu0 0.0
        %1759 = vmatpush1.xpose.msra.mxu0 0.0
        %1760 = vmatprep.subr.mxu0 0.0
        %1761 = vmatpush1.xpose.msra.mxu0 0.0
        %1762 = vmatprep.subr.mxu0 0.0
        %1763 = vmatpush1.xpose.msra.mxu0 0.0
        %1764 = vmatprep.subr.mxu0 0.0
        %1765 = vmatpush1.xpose.msra.mxu0 0.0
        %1766 = vmatprep.subr.mxu0 0.0
        %1767 = vmatpush1.xpose.msra.mxu0 0.0
        %1768 = vmatprep.subr.mxu0 0.0
        %1769 = vmatpush1.xpose.msra.mxu0 0.0
        %1770 = vmatprep.subr.mxu0 0.0
        %1771 = vmatpush1.xpose.msra.mxu0 0.0
        %1772 = vmatprep.subr.mxu0 0.0
        %1773 = vmatpush1.xpose.msra.mxu0 0.0
        %1774 = vmatprep.subr.mxu0 0.0
        %1775 = vmatpush1.xpose.msra.mxu0 0.0
        %1776 = vmatprep.subr.mxu0 0.0
        %1777 = vmatpush1.xpose.msra.mxu0 0.0
        %1778 = vmatprep.subr.mxu0 0.0
        %1779 = vmatpush1.xpose.msra.mxu0 0.0
        %1780 = vmatprep.subr.mxu0 0.0
        %1781 = vmatpush1.xpose.msra.mxu0 0.0
        %1782 = vmatprep.subr.mxu0 0.0
        %1783 = vmatpush1.xpose.msra.mxu0 0.0
        %1784 = vmatprep.subr.mxu0 0.0
        %1785 = vmatpush1.xpose.msra.mxu0 0.0
        %1786 = vmatprep.subr.mxu0 0.0
        %1787 = vmatpush1.xpose.msra.mxu0 0.0
        %1788 = vmatprep.subr.mxu0 0.0
        %1789 = vmatpush1.xpose.msra.mxu0 0.0
        %1790 = vmatprep.subr.mxu0 0.0
        %1791 = vmatpush1.xpose.msra.mxu0 0.0
        %1792 = vmatprep.subr.mxu0 0.0
        %1793 = vmatpush1.xpose.msra.mxu0 0.0
        %1794 = vmatprep.subr.mxu0 0.0
        %1795 = vmatpush1.xpose.msra.mxu0 0.0
        %1796 = vmatprep.subr.mxu0 0.0
        %1797 = vmatpush1.xpose.msra.mxu0 0.0
        %1798 = vmatprep.subr.mxu0 0.0
        %1799 = vmatpush1.xpose.msra.mxu0 0.0
        %1800 = vmatprep.subr.mxu0 0.0
        %1801 = vmatpush1.xpose.msra.mxu0 0.0
        %1802 = vmatprep.mubr.f32.mxu0 0.0
        %1803 = vmatmul.mubr.f32.gmra.mrb[0].mxu0 %v1733
        %v1804 = vpop.f32.mrb[0].mxu0
        %v1805 = vadd.f32 0.0, %v1804
        %v1806 = vpop.f32.mrb[0].mxu0
        %1807 = vdwg.mxu0
        %v1808 = vmul.f32 %v1805, 0.35355338
        %v1809 = vsel %vm322, %v1808, -1000000.0
        %v1810 = vsel %vm557, %v1809, -inf
        %1811 = vmax.xlane.f32.xlu0 %v1810
        %v1812 = vpop.xlane.xlu0 %1811
        %v1813 = vsub.f32 %v1809, %v1812
        %v1814 = vmul.f32 %v1813, 1.442695
        %v1815 = vpow.pop %v1814
        %v1816 = vsel %vm557, %v1815, 0.0
        %1817 = vadd.xlane.f32.xlu0 %v1816
        %v1818 = vpop.xlane.xlu0 %1817
        %v1819 = vrcp.pop %v1818
        %v1820 = vmul.f32 %v1815, %v1819
        %v1822 = vsel %vm557, %v1820, 0
        %1824 = vmatprep.subr.mxu0 0.0
        %1825 = vmatpush1.msra.mxu0 %v1729
        %1826 = vmatprep.subr.mxu0 0.0
        %1827 = vmatpush1.msra.mxu0 0.0
        %1828 = vmatprep.subr.mxu0 0.0
        %1829 = vmatpush1.msra.mxu0 0.0
        %1830 = vmatprep.subr.mxu0 0.0
        %1831 = vmatpush1.msra.mxu0 0.0
        %1832 = vmatprep.subr.mxu0 0.0
        %1833 = vmatpush1.msra.mxu0 0.0
        %1834 = vmatprep.subr.mxu0 0.0
        %1835 = vmatpush1.msra.mxu0 0.0
        %1836 = vmatprep.subr.mxu0 0.0
        %1837 = vmatpush1.msra.mxu0 0.0
        %1838 = vmatprep.subr.mxu0 0.0
        %1839 = vmatpush1.msra.mxu0 0.0
        %1840 = vmatprep.subr.mxu0 0.0
        %1841 = vmatpush1.msra.mxu0 0.0
        %1842 = vmatprep.subr.mxu0 0.0
        %1843 = vmatpush1.msra.mxu0 0.0
        %1844 = vmatprep.subr.mxu0 0.0
        %1845 = vmatpush1.msra.mxu0 0.0
        %1846 = vmatprep.subr.mxu0 0.0
        %1847 = vmatpush1.msra.mxu0 0.0
        %1848 = vmatprep.subr.mxu0 0.0
        %1849 = vmatpush1.msra.mxu0 0.0
        %1850 = vmatprep.subr.mxu0 0.0
        %1851 = vmatpush1.msra.mxu0 0.0
        %1852 = vmatprep.subr.mxu0 0.0
        %1853 = vmatpush1.msra.mxu0 0.0
        %1854 = vmatprep.subr.mxu0 0.0
        %1855 = vmatpush1.msra.mxu0 0.0
        %1856 = vmatprep.subr.mxu0 0.0
        %1857 = vmatpush1.msra.mxu0 0.0
        %1858 = vmatprep.subr.mxu0 0.0
        %1859 = vmatpush1.msra.mxu0 0.0
        %1860 = vmatprep.subr.mxu0 0.0
        %1861 = vmatpush1.msra.mxu0 0.0
        %1862 = vmatprep.subr.mxu0 0.0
        %1863 = vmatpush1.msra.mxu0 0.0
        %1864 = vmatprep.subr.mxu0 0.0
        %1865 = vmatpush1.msra.mxu0 0.0
        %1866 = vmatprep.subr.mxu0 0.0
        %1867 = vmatpush1.msra.mxu0 0.0
        %1868 = vmatprep.subr.mxu0 0.0
        %1869 = vmatpush1.msra.mxu0 0.0
        %1870 = vmatprep.subr.mxu0 0.0
        %1871 = vmatpush1.msra.mxu0 0.0
        %1872 = vmatprep.subr.mxu0 0.0
        %1873 = vmatpush1.msra.mxu0 0.0
        %1874 = vmatprep.subr.mxu0 0.0
        %1875 = vmatpush1.msra.mxu0 0.0
        %1876 = vmatprep.subr.mxu0 0.0
        %1877 = vmatpush1.msra.mxu0 0.0
        %1878 = vmatprep.subr.mxu0 0.0
        %1879 = vmatpush1.msra.mxu0 0.0
        %1880 = vmatprep.subr.mxu0 0.0
        %1881 = vmatpush1.msra.mxu0 0.0
        %1882 = vmatprep.subr.mxu0 0.0
        %1883 = vmatpush1.msra.mxu0 0.0
        %1884 = vmatprep.subr.mxu0 0.0
        %1885 = vmatpush1.msra.mxu0 0.0
        %1886 = vmatprep.subr.mxu0 0.0
        %1887 = vmatpush1.msra.mxu0 0.0
        %1888 = vmatprep.mubr.f32.mxu0 0.0
        %1889 = vmatmul.mubr.f32.gmra.mrb[0].mxu0 %v1822
        %v1890 = vpop.f32.mrb[0].mxu0
        %v1891 = vadd.f32 0.0, %v1890
        %v1892 = vpop.f32.mrb[0].mxu0
        %1893 = vdwg.mxu0
        %1895 = vrot.lane.b32.xlu0 %v1891, 24
        %v1896 = vpop.permute.xlu0 %1895
        %vm1898 = vcmask 261312
        %1899 = vst.msk [vmem:[#allocation2] sm:$0xff] %vm1898, %v1896
        %v1900 = vld [vmem:[#allocation2] sm:$0xff]
        %v1901 = vld [vmem:[%s5] sm:$0xff]
        %v1902 = vld [vmem:[%s5 + $0x8] sm:$0xff]
        %v1903 = vld [vmem:[%s5 + $0x10] sm:$0xff]
        %v1904 = vld [vmem:[%s5 + $0x18] sm:$0xff]
        %v1906 = vsel %vm327, %v1900, 0
        %1908 = vmatprep.subr.mxu0 0.0
        %1909 = vmatpush1.msra.mxu0 %v1901
        %1910 = vmatprep.subr.mxu0 0.0
        %1911 = vmatpush1.msra.mxu0 %v1902
        %1912 = vmatprep.subr.mxu0 0.0
        %1913 = vmatpush1.msra.mxu0 %v1903
        %1914 = vmatprep.subr.mxu0 0.0
        %1915 = vmatpush1.msra.mxu0 %v1904
        %1916 = vmatprep.subr.mxu0 0.0
        %1917 = vmatpush1.msra.mxu0 0.0
        %1918 = vmatprep.subr.mxu0 0.0
        %1919 = vmatpush1.msra.mxu0 0.0
        %1920 = vmatprep.subr.mxu0 0.0
        %1921 = vmatpush1.msra.mxu0 0.0
        %1922 = vmatprep.subr.mxu0 0.0
        %1923 = vmatpush1.msra.mxu0 0.0
        %1924 = vmatprep.subr.mxu0 0.0
        %1925 = vmatpush1.msra.mxu0 0.0
        %1926 = vmatprep.subr.mxu0 0.0
        %1927 = vmatpush1.msra.mxu0 0.0
        %1928 = vmatprep.subr.mxu0 0.0
        %1929 = vmatpush1.msra.mxu0 0.0
        %1930 = vmatprep.subr.mxu0 0.0
        %1931 = vmatpush1.msra.mxu0 0.0
        %1932 = vmatprep.subr.mxu0 0.0
        %1933 = vmatpush1.msra.mxu0 0.0
        %1934 = vmatprep.subr.mxu0 0.0
        %1935 = vmatpush1.msra.mxu0 0.0
        %1936 = vmatprep.subr.mxu0 0.0
        %1937 = vmatpush1.msra.mxu0 0.0
        %1938 = vmatprep.subr.mxu0 0.0
        %1939 = vmatpush1.msra.mxu0 0.0
        %1940 = vmatprep.subr.mxu0 0.0
        %1941 = vmatpush1.msra.mxu0 0.0
        %1942 = vmatprep.subr.mxu0 0.0
        %1943 = vmatpush1.msra.mxu0 0.0
        %1944 = vmatprep.subr.mxu0 0.0
        %1945 = vmatpush1.msra.mxu0 0.0
        %1946 = vmatprep.subr.mxu0 0.0
        %1947 = vmatpush1.msra.mxu0 0.0
        %1948 = vmatprep.subr.mxu0 0.0
        %1949 = vmatpush1.msra.mxu0 0.0
        %1950 = vmatprep.subr.mxu0 0.0
        %1951 = vmatpush1.msra.mxu0 0.0
        %1952 = vmatprep.subr.mxu0 0.0
        %1953 = vmatpush1.msra.mxu0 0.0
        %1954 = vmatprep.subr.mxu0 0.0
        %1955 = vmatpush1.msra.mxu0 0.0
        %1956 = vmatprep.subr.mxu0 0.0
        %1957 = vmatpush1.msra.mxu0 0.0
        %1958 = vmatprep.subr.mxu0 0.0
        %1959 = vmatpush1.msra.mxu0 0.0
        %1960 = vmatprep.subr.mxu0 0.0
        %1961 = vmatpush1.msra.mxu0 0.0
        %1962 = vmatprep.subr.mxu0 0.0
        %1963 = vmatpush1.msra.mxu0 0.0
        %1964 = vmatprep.subr.mxu0 0.0
        %1965 = vmatpush1.msra.mxu0 0.0
        %1966 = vmatprep.subr.mxu0 0.0
        %1967 = vmatpush1.msra.mxu0 0.0
        %1968 = vmatprep.subr.mxu0 0.0
        %1969 = vmatpush1.msra.mxu0 0.0
        %1970 = vmatprep.subr.mxu0 0.0
        %1971 = vmatpush1.msra.mxu0 0.0
        %1972 = vmatprep.mubr.f32.mxu0 0.0
        %1973 = vmatmul.mubr.f32.gmra.mrb[0].mxu0 %v1906
        %v1974 = vpop.f32.mrb[0].mxu0
        %v1975 = vadd.f32 0.0, %v1974
        %v1976 = vpop.f32.mrb[0].mxu0
        %1977 = vdwg.mxu0
        %v1978 = vadd.f32 %v316, %v1975
        %v1979 = vld [vmem:[%s7] sm:$0x1]
        %v1980 = vld [vmem:[%s7 + $0x1] sm:$0x1]
        %v1981 = vsel %vm327, %v1978, 0.0
        %1982 = vadd.xlane.f32.xlu0 %v1981
        %v1983 = vpop.xlane.xlu0 %1982
        %v1984 = vrcp.pop 32.0
        %v1985 = vmul.f32 %v1983, %v1984
        %v1986 = vsub.f32 %v1978, %v1985
        %v1987 = vmul.f32 %v1986, %v1986
        %v1988 = vsel %vm327, %v1987, 0.0
        %1989 = vadd.xlane.f32.xlu0 %v1988
        %v1990 = vpop.xlane.xlu0 %1989
        %v1991 = vmul.f32 %v1990, %v1984
        %v1992 = vadd.f32 %v1991, 1e-05
        %v1993 = vrsqrt.pop %v1992
        %v1994 = vmul.f32 %v1986, %v1993
        %v1995 = vlaneseq
        %v1996 = vshrl.u32 %v1995, 7
        %v1997 = vsub.s32 0, %v1996
        %v1998 = vrot.slane %v1979, %v1997
        %v1999 = vmul.f32 %v1994, %v1998
        %v2000 = vlaneseq
        %v2001 = vshrl.u32 %v2000, 7
        %v2002 = vsub.s32 0, %v2001
        %v2003 = vrot.slane %v1980, %v2002
        %v2004 = vadd.f32 %v1999, %v2003
        %v2005 = vld [vmem:[%s6] sm:$0xff]
        %v2006 = vld [vmem:[%s6 + $0x8] sm:$0xff]
        %v2007 = vld [vmem:[%s6 + $0x10] sm:$0xff]
        %v2008 = vld [vmem:[%s6 + $0x18] sm:$0xff]
        %v2009 = vld [vmem:[%s6 + $0x20] sm:$0x1]
        %v2010 = vlaneseq
        %v2011 = vshrl.u32 %v2010, 7
        %v2012 = vsub.s32 0, %v2011
        %v2013 = vrot.slane %v2009, %v2012
        %v2015 = vsel %vm327, %v2004, 0
        %2017 = vmatprep.subr.mxu0 0.0
        %2018 = vmatpush1.msra.mxu0 %v2005
        %2019 = vmatprep.subr.mxu0 0.0
        %2020 = vmatpush1.msra.mxu0 %v2006
        %2021 = vmatprep.subr.mxu0 0.0
        %2022 = vmatpush1.msra.mxu0 %v2007
        %2023 = vmatprep.subr.mxu0 0.0
        %2024 = vmatpush1.msra.mxu0 %v2008
        %2025 = vmatprep.subr.mxu0 0.0
        %2026 = vmatpush1.msra.mxu0 0.0
        %2027 = vmatprep.subr.mxu0 0.0
        %2028 = vmatpush1.msra.mxu0 0.0
        %2029 = vmatprep.subr.mxu0 0.0
        %2030 = vmatpush1.msra.mxu0 0.0
        %2031 = vmatprep.subr.mxu0 0.0
        %2032 = vmatpush1.msra.mxu0 0.0
        %2033 = vmatprep.subr.mxu0 0.0
        %2034 = vmatpush1.msra.mxu0 0.0
        %2035 = vmatprep.subr.mxu0 0.0
        %2036 = vmatpush1.msra.mxu0 0.0
        %2037 = vmatprep.subr.mxu0 0.0
        %2038 = vmatpush1.msra.mxu0 0.0
        %2039 = vmatprep.subr.mxu0 0.0
        %2040 = vmatpush1.msra.mxu0 0.0
        %2041 = vmatprep.subr.mxu0 0.0
        %2042 = vmatpush1.msra.mxu0 0.0
        %2043 = vmatprep.subr.mxu0 0.0
        %2044 = vmatpush1.msra.mxu0 0.0
        %2045 = vmatprep.subr.mxu0 0.0
        %2046 = vmatpush1.msra.mxu0 0.0
        %2047 = vmatprep.subr.mxu0 0.0
        %2048 = vmatpush1.msra.mxu0 0.0
        %2049 = vmatprep.subr.mxu0 0.0
        %2050 = vmatpush1.msra.mxu0 0.0
        %2051 = vmatprep.subr.mxu0 0.0
        %2052 = vmatpush1.msra.mxu0 0.0
        %2053 = vmatprep.subr.mxu0 0.0
        %2054 = vmatpush1.msra.mxu0 0.0
        %2055 = vmatprep.subr.mxu0 0.0
        %2056 = vmatpush1.msra.mxu0 0.0
        %2057 = vmatprep.subr.mxu0 0.0
        %2058 = vmatpush1.msra.mxu0 0.0
        %2059 = vmatprep.subr.mxu0 0.0
        %2060 = vmatpush1.msra.mxu0 0.0
        %2061 = vmatprep.subr.mxu0 0.0
        %2062 = vmatpush1.msra.mxu0 0.0
        %2063 = vmatprep.subr.mxu0 0.0
        %2064 = vmatpush1.msra.mxu0 0.0
        %2065 = vmatprep.subr.mxu0 0.0
        %2066 = vmatpush1.msra.mxu0 0.0
        %2067 = vmatprep.subr.mxu0 0.0
        %2068 = vmatpush1.msra.mxu0 0.0
        %2069 = vmatprep.subr.mxu0 0.0
        %2070 = vmatpush1.msra.mxu0 0.0
        %2071 = vmatprep.subr.mxu0 0.0
        %2072 = vmatpush1.msra.mxu0 0.0
        %2073 = vmatprep.subr.mxu0 0.0
        %2074 = vmatpush1.msra.mxu0 0.0
        %2075 = vmatprep.subr.mxu0 0.0
        %2076 = vmatpush1.msra.mxu0 0.0
        %2077 = vmatprep.subr.mxu0 0.0
        %2078 = vmatpush1.msra.mxu0 0.0
        %2079 = vmatprep.subr.mxu0 0.0
        %2080 = vmatpush1.msra.mxu0 0.0
        %2081 = vmatprep.mubr.f32.mxu0 0.0
        %2082 = vmatmul.mubr.f32.gmra.mrb[0].mxu0 %v2015
        %v2083 = vpop.f32.mrb[0].mxu0
        %v2084 = vadd.f32 %v2013, %v2083
        %v2085 = vpop.f32.mrb[0].mxu0
        %2086 = vdwg.mxu0
        %v2087 = vmul.f32 %v2084, 0.5
        %v2088 = vmul.f32 %v2084, 0.70710677
        %v2089 = verf.f32.pop %v2088
        %v2090 = vadd.f32 %v2089, 1.0
        %v2091 = vmul.f32 %v2087, %v2090
        %v2092 = vld [vmem:[%s5 + $0x20] sm:$0xff]
        %v2093 = vld [vmem:[%s5 + $0x28] sm:$0xff]
        %v2094 = vld [vmem:[%s5 + $0x30] sm:$0xff]
        %v2095 = vld [vmem:[%s5 + $0x38] sm:$0xff]
        %v2096 = vld [vmem:[%s5 + $0x40] sm:$0xff]
        %v2097 = vld [vmem:[%s5 + $0x48] sm:$0xff]
        %v2098 = vld [vmem:[%s5 + $0x50] sm:$0xff]
        %v2099 = vld [vmem:[%s5 + $0x58] sm:$0xff]
        %v2100 = vld [vmem:[%s7 + $0x4] sm:$0x1]
        %v2101 = vlaneseq
        %v2102 = vshrl.u32 %v2101, 7
        %v2103 = vsub.s32 0, %v2102
        %v2104 = vrot.slane %v2100, %v2103
        %vm2105 = vcmask 523264
        %v2107 = vsel %vm2105, %v2091, 0
        %2109 = vmatprep.subr.mxu0 0.0
        %2110 = vmatpush1.msra.mxu0 %v2092
        %2111 = vmatprep.subr.mxu0 0.0
        %2112 = vmatpush1.msra.mxu0 %v2093
        %2113 = vmatprep.subr.mxu0 0.0
        %2114 = vmatpush1.msra.mxu0 %v2094
        %2115 = vmatprep.subr.mxu0 0.0
        %2116 = vmatpush1.msra.mxu0 %v2095
        %2117 = vmatprep.subr.mxu0 0.0
        %2118 = vmatpush1.msra.mxu0 %v2096
        %2119 = vmatprep.subr.mxu0 0.0
        %2120 = vmatpush1.msra.mxu0 %v2097
        %2121 = vmatprep.subr.mxu0 0.0
        %2122 = vmatpush1.msra.mxu0 %v2098
        %2123 = vmatprep.subr.mxu0 0.0
        %2124 = vmatpush1.msra.mxu0 %v2099
        %2125 = vmatprep.subr.mxu0 0.0
        %2126 = vmatpush1.msra.mxu0 0.0
        %2127 = vmatprep.subr.mxu0 0.0
        %2128 = vmatpush1.msra.mxu0 0.0
        %2129 = vmatprep.subr.mxu0 0.0
        %2130 = vmatpush1.msra.mxu0 0.0
        %2131 = vmatprep.subr.mxu0 0.0
        %2132 = vmatpush1.msra.mxu0 0.0
        %2133 = vmatprep.subr.mxu0 0.0
        %2134 = vmatpush1.msra.mxu0 0.0
        %2135 = vmatprep.subr.mxu0 0.0
        %2136 = vmatpush1.msra.mxu0 0.0
        %2137 = vmatprep.subr.mxu0 0.0
        %2138 = vmatpush1.msra.mxu0 0.0
        %2139 = vmatprep.subr.mxu0 0.0
        %2140 = vmatpush1.msra.mxu0 0.0
        %2141 = vmatprep.subr.mxu0 0.0
        %2142 = vmatpush1.msra.mxu0 0.0
        %2143 = vmatprep.subr.mxu0 0.0
        %2144 = vmatpush1.msra.mxu0 0.0
        %2145 = vmatprep.subr.mxu0 0.0
        %2146 = vmatpush1.msra.mxu0 0.0
        %2147 = vmatprep.subr.mxu0 0.0
        %2148 = vmatpush1.msra.mxu0 0.0
        %2149 = vmatprep.subr.mxu0 0.0
        %2150 = vmatpush1.msra.mxu0 0.0
        %2151 = vmatprep.subr.mxu0 0.0
        %2152 = vmatpush1.msra.mxu0 0.0
        %2153 = vmatprep.subr.mxu0 0.0
        %2154 = vmatpush1.msra.mxu0 0.0
        %2155 = vmatprep.subr.mxu0 0.0
        %2156 = vmatpush1.msra.mxu0 0.0
        %2157 = vmatprep.subr.mxu0 0.0
        %2158 = vmatpush1.msra.mxu0 0.0
        %2159 = vmatprep.subr.mxu0 0.0
        %2160 = vmatpush1.msra.mxu0 0.0
        %2161 = vmatprep.subr.mxu0 0.0
        %2162 = vmatpush1.msra.mxu0 0.0
        %2163 = vmatprep.subr.mxu0 0.0
        %2164 = vmatpush1.msra.mxu0 0.0
        %2165 = vmatprep.subr.mxu0 0.0
        %2166 = vmatpush1.msra.mxu0 0.0
        %2167 = vmatprep.subr.mxu0 0.0
        %2168 = vmatpush1.msra.mxu0 0.0
        %2169 = vmatprep.subr.mxu0 0.0
        %2170 = vmatpush1.msra.mxu0 0.0
        %2171 = vmatprep.subr.mxu0 0.0
        %2172 = vmatpush1.msra.mxu0 0.0
        %2173 = vmatprep.mubr.f32.mxu0 0.0
        %2174 = vmatmul.mubr.f32.gmra.mrb[0].mxu0 %v2107
        %v2175 = vpop.f32.mrb[0].mxu0
        %v2176 = vadd.f32 %v2104, %v2175
        %v2177 = vpop.f32.mrb[0].mxu0
        %2178 = vdwg.mxu0
        %v2179 = vadd.f32 %v2004, %v2176
        %v2180 = vld [vmem:[%s7 + $0x2] sm:$0x1]
        %v2181 = vld [vmem:[%s7 + $0x3] sm:$0x1]
        %v2182 = vsel %vm327, %v2179, 0.0
        %2183 = vadd.xlane.f32.xlu0 %v2182
        %v2184 = vpop.xlane.xlu0 %2183
        %v2185 = vmul.f32 %v2184, %v1984
        %v2186 = vsub.f32 %v2179, %v2185
        %v2187 = vmul.f32 %v2186, %v2186
        %v2188 = vsel %vm327, %v2187, 0.0
        %2189 = vadd.xlane.f32.xlu0 %v2188
        %v2190 = vpop.xlane.xlu0 %2189
        %v2191 = vmul.f32 %v2190, %v1984
        %v2192 = vadd.f32 %v2191, 1e-05
        %v2193 = vrsqrt.pop %v2192
        %v2194 = vmul.f32 %v2186, %v2193
        %v2195 = vlaneseq
        %v2196 = vshrl.u32 %v2195, 7
        %v2197 = vsub.s32 0, %v2196
        %v2198 = vrot.slane %v2180, %v2197
        %v2199 = vmul.f32 %v2194, %v2198
        %v2200 = vlaneseq
        %v2201 = vshrl.u32 %v2200, 7
        %v2202 = vsub.s32 0, %v2201
        %v2203 = vrot.slane %v2181, %v2202
        %v2204 = vadd.f32 %v2199, %v2203
        %2205 = vst.msk [vmem:[%s302] sm:$0xff] %vm327, %v2204
        %s2206 = sand.u32 %s198, 1
        %s2207 = scalar_lea.sflag [#allocation6], %s2206
        %s2208 = sand.u32 %s198, 1
        %s2209 = smul.addr %s2208, 8
        %s2210 = scalar_lea.vmem [#allocation5], %s2209
        // Predicated region
        $region49: #{transformer_encoder.1} parent=47 // pred_check
          %p2211 = pneg %p208
        $region50: #{transformer_encoder.1} parent=47 // pred_check_branch
          %2213 = sbr.rel (%p2211) target = $region52
        $region51: #{transformer_encoder.1} parent=47 // pred_region
          %s2215 = ssub.s32 128, 128
          %2216 = vsyncadd %s2207, %s2215
          %s2217 = smul.addr %s28, 128
          %s2218 = scalar_lea.hbm %s8, %s2217
          %s2220 = sshll.u32 %s2210, 4
          %s2221 = int_to_ptr.vmem [resolvable:$true] %s2220
          %2223 = dma.vmem_to_hbm [thread:$0]  %s2221, 128, %s2218, %s2207
        $region52: #{transformer_encoder.1} parent=47 // pred_fallthru
          _
      $region48: #{transformer_encoder.1} parent=5 // pred_fallthru
        _
      %p2224 = scmp.le.s32.totalorder 2, %s23
      // Predicated region
      $region53: #{transformer_encoder.1} parent=5 // pred_check
        %p2225 = pneg %p2224
      $region54: #{transformer_encoder.1} parent=5 // pred_check_branch
        %2227 = sbr.rel (%p2225) target = $region56
      $region55: #{transformer_encoder.1} parent=5 // pred_region
        %s2228 = ssub.s32 %s23, 2
        // Predicated region
        $region57: #{transformer_encoder.1} parent=55 // pred_check
          %p2229 = pneg %p214
        $region58: #{transformer_encoder.1} parent=55 // pred_check_branch
          %2231 = sbr.rel (%p2229) target = $region60
        $region59: #{transformer_encoder.1} parent=55 // pred_region
          %s2232 = sand.u32 %s199, 1
          %s2233 = scalar_lea.sflag [#allocation6], %s2232
          %s2234 = sand.u32 %s199, 1
          %s2235 = smul.addr %s2234, 8
          %s2236 = scalar_lea.vmem [#allocation5], %s2235
          %2237 = dma.done %s2233, 128
        $region60: #{transformer_encoder.1} parent=55 // pred_fallthru
          _
      $region56: #{transformer_encoder.1} parent=5 // pred_fallthru
        _
    $region6: #{transformer_encoder.1} parent=1 // loop_footer
      %s27 = sadd.s32 1, %s23
    $region7: #{transformer_encoder.1} parent=1 // loop_footer_branch
      %22 = sbr.rel target = $region3
    $region8: #{transformer_encoder.1} parent=1 // loop_exit
      _
    %2238 = vsyncpa [#allocation6], 1
    %s2239 = scalar_lea.sflag [#allocation6], 1
    %2240 = vsyncpa %s2239, 1

</llo_original>
